<compile_context>
chip_gen: v7x
topology: tpu7x:2x2x1
jax: 0.10.0
libtpu: 0.0.40
codegen_flags: <defaults>
</compile_context>

<pallas_src>
import functools

import jax
import jax.numpy as jnp
from jax import lax
from jax.experimental import pallas as pl
from jax.experimental.pallas import tpu as pltpu


# -----------------------------------------------------------------------------
# Packed-parameter layout helpers (shared by wrapper and kernel).
# -----------------------------------------------------------------------------
def _round8(n):
    return (n + 7) // 8 * 8


def _param_offsets(D, H):
    """8-row-aligned row offsets inside the packed (rows, 4H) parameter array."""
    o_wih = 0
    o_whh = o_wih + _round8(D)      # W_ih^T  : (D, 4H)
    o_bias = o_whh + _round8(H)     # W_hh^T  : (H, 4H)
    o_gamma = o_bias + 8            # bias    : (1, 4H)
    o_beta = o_gamma + 8            # gamma   : (1, H)
    o_ut = o_beta + 8               # beta    : (1, H)
    total = o_ut + _round8(H)       # U^T     : (H, B)
    return o_wih, o_whh, o_bias, o_gamma, o_beta, o_ut, total


def _pad_block(a, rows, lanes):
    r, c = a.shape
    return jnp.pad(a, ((0, rows - r), (0, lanes - c)))


# -----------------------------------------------------------------------------
# Fused kernel: LSTM over the concatenated (question ++ answer) batch,
# masked mean pool, tanh/relu/batchnorm, two MXU matmuls, loss reduction.
# -----------------------------------------------------------------------------
def amrnl_fused_kernel(x_ref, mask_ref, params_ref, out_ref, *, B, T, D, H):
    # x_ref     : (T*2B, D)  time-major flattened word vectors; rows
    #             [t*2B, (t+1)*2B) hold timestep t for [question ; answer].
    # mask_ref  : (T*2B, H)  precomputed (t < len) / max_len scale, lane-bcast.
    # params_ref: (120, 4H)  packed [W_ih^T ; W_hh^T ; bias ; gamma ; beta ; U^T]
    #             with 8-row-aligned segment offsets.
    # out_ref   : (1, 1)     scalar loss (SMEM).
    B2 = 2 * B
    H4 = 4 * H
    o_wih, o_whh, o_bias, o_gamma, o_beta, o_ut, _ = _param_offsets(D, H)

    # MXU operands in bf16 (single-pass on v5e/v6e/v7x); accum stays f32.
    wih_bf = params_ref[o_wih:o_wih + D, :].astype(jnp.bfloat16)     # (D, 4H)
    whh_bf = params_ref[o_whh:o_whh + H, :].astype(jnp.bfloat16)     # (H, 4H)
    bias = params_ref[o_bias:o_bias + 1, :]                          # (1, 4H)

    # Hoisted input projection: one big MXU matmul covering every timestep of
    # both halves; only h @ W_hh stays on the serial recurrence path.
    x_bf = x_ref[...].astype(jnp.bfloat16)
    xproj = jnp.dot(x_bf, wih_bf, preferred_element_type=jnp.float32) + bias

    # Single-tanh gate activation (hoisted lane constants):
    #   g lanes [2H,3H): act = tanh(x)
    #   i/f/o lanes    : act = sigmoid(x) = 0.5*tanh(0.5*x) + 0.5
    lane = lax.broadcasted_iota(jnp.int32, (B2, H4), 1)
    is_g = (lane >= 2 * H) & (lane < 3 * H)
    half = jnp.where(is_g, jnp.float32(1.0), jnp.float32(0.5))
    off = jnp.where(is_g, jnp.float32(0.0), jnp.float32(0.5))

    h = jnp.zeros((B2, H), jnp.float32)
    c = jnp.zeros((B2, H), jnp.float32)
    acc = jnp.zeros((B2, H), jnp.float32)

    # T is small and static: fully unrolled recurrence (single basic block) so
    # gate math of step t overlaps with the MXU issue of step t+1.
    for t in range(T):
        r0 = t * B2
        gates = xproj[r0:r0 + B2, :] + jnp.dot(
            h.astype(jnp.bfloat16), whh_bf,
            preferred_element_type=jnp.float32)                      # (2B, 4H)
        tg = jnp.tanh(gates * half)          # one EUP pass per step
        act = tg * half + off                # VPU fma: sigmoid for i/f/o
        i_g = act[:, 0:H]
        f_g = act[:, H:2 * H]
        g_g = act[:, 2 * H:3 * H]
        o_g = act[:, 3 * H:4 * H]
        c = f_g * c + i_g * g_g
        h = o_g * jnp.tanh(c)
        # mask already contains the 1/max_len factor -> acc ends as the mean.
        acc = acc + mask_ref[r0:r0 + B2, :] * h

    # Split pooled rows: first B = question, last B = answer.
    q = jnp.tanh(acc[0:B, :])                          # tanh_q
    a = jnp.maximum(acc[B:B2, :], 0.0)                 # relu

    # BatchNorm1d, training mode: batch mean, biased variance, eps=1e-5.
    mean = jnp.mean(a, axis=0, keepdims=True)
    cen = a - mean
    var = jnp.mean(cen * cen, axis=0, keepdims=True)
    gamma = params_ref[o_gamma:o_gamma + 1, 0:H]
    beta = params_ref[o_beta:o_beta + 1, 0:H]
    a = cen * lax.rsqrt(var + 1e-5) * gamma + beta

    # (Q @ A^T) * (Q @ U^T); U was pre-transposed and packed in the wrapper.
    u_t = params_ref[o_ut:o_ut + H, 0:B]               # (H, B)
    dn = (((1,), (1,)), ((), ()))
    m_qa = lax.dot_general(q, a, dn, preferred_element_type=jnp.float32)
    m_qu = jnp.dot(q, u_t, preferred_element_type=jnp.float32)
    loss = m_qa * m_qu                                 # (B, B)

    loss = loss - loss[0:1, :]                         # loss.sub_(loss[[0]])
    loss = loss + 0.001                                # loss.add_(constant)
    loss = jnp.maximum(loss, 0.0)                      # F.relu
    out_ref[0, 0] = jnp.sum(loss)                      # torch.sum -> SMEM


def amrnl_fused(x_flat, mask_bc, params, *, B, T, D, H):
    vmem = pl.BlockSpec(memory_space=pltpu.MemorySpace.VMEM)
    smem = pl.BlockSpec(memory_space=pltpu.MemorySpace.SMEM)
    kernel = functools.partial(amrnl_fused_kernel, B=B, T=T, D=D, H=H)
    out = pl.pallas_call(
        kernel,
        out_shape=jax.ShapeDtypeStruct((1, 1), jnp.float32),
        in_specs=[vmem, vmem, vmem],
        out_specs=smem,
    )(x_flat, mask_bc, params)
    return out[0, 0]


# -----------------------------------------------------------------------------
# Model: parameter setup + glue (embedding gathers, length sort, mask build,
# parameter packing) stays in plain JAX; all compute runs in the single fused
# Pallas kernel.
# -----------------------------------------------------------------------------
class AMRNLPallas:
    def __init__(self, key, *, n_content=20, seq_len=8, vocab=50,
                 embed_dim=32, hidden=32, user_size=10):
        assert embed_dim == hidden, "Q @ U^T requires user dim == lstm hidden"
        ks = jax.random.split(key, 8)
        self.seq_len = seq_len
        self.hidden = hidden
        self.embed_dim = embed_dim

        # Frozen "data" embeddings (content word indices, lengths, word vecs).
        self.content = jax.random.randint(ks[0], (n_content, seq_len), 0, vocab)
        self.content_len = jax.random.randint(ks[1], (n_content, 1), 1, seq_len + 1)
        self.word_embed = 0.1 * jax.random.normal(ks[2], (vocab, embed_dim),
                                                  jnp.float32)

        # Trainable user embedding: xavier_uniform_.
        limit = (6.0 / (user_size + embed_dim)) ** 0.5
        self.user_embed = jax.random.uniform(ks[3], (user_size, embed_dim),
                                             jnp.float32, -limit, limit)

        # LSTM params (PyTorch init: U(-1/sqrt(H), 1/sqrt(H)), gates i,f,g,o).
        stdv = 1.0 / (hidden ** 0.5)
        w_ih = jax.random.uniform(ks[4], (4 * hidden, embed_dim), jnp.float32,
                                  -stdv, stdv)
        w_hh = jax.random.uniform(ks[5], (4 * hidden, hidden), jnp.float32,
                                  -stdv, stdv)
        b_ih = jax.random.uniform(ks[6], (4 * hidden,), jnp.float32, -stdv, stdv)
        b_hh = jax.random.uniform(ks[7], (4 * hidden,), jnp.float32, -stdv, stdv)
        wih_t = w_ih.T                          # (D, 4H)
        whh_t = w_hh.T                          # (H, 4H)
        lstm_bias = (b_ih + b_hh)[None, :]      # (1, 4H)

        # BatchNorm1d(hidden) affine params.
        bn_gamma = jnp.ones((1, hidden), jnp.float32)
        bn_beta = jnp.zeros((1, hidden), jnp.float32)

        # Pack static parameters once into a single lane-dense (rows, 4H) array
        # (single input DMA at kernel launch; u_t is appended per forward call).
        L = 4 * hidden
        self.params_static = jnp.concatenate([
            _pad_block(wih_t, _round8(embed_dim), L),
            _pad_block(whh_t, _round8(hidden), L),
            _pad_block(lstm_bias, 8, L),
            _pad_block(bn_gamma, 8, L),
            _pad_block(bn_beta, 8, L),
        ], axis=0)

        self.constant = 0.001

    def _prep_half(self, batch_id):
        """Gather word vectors, sort by length desc, build time-major input
        and the (t < len)/max_len mean-pooling mask."""
        word_idx = jnp.take(self.content, batch_id, axis=0)           # (B, T)
        lengths = jnp.take(self.content_len, batch_id, axis=0)[:, 0]  # (B,)
        word_vecs = jnp.take(self.word_embed, word_idx, axis=0)       # (B, T, D)

        # Sort by length descending (pack_padded_sequence requirement).
        # The original's `perm_index.sort(0)` "unsort" is an identity
        # permutation, so the result stays in length-sorted order.
        perm = jnp.argsort(-lengths)
        sorted_lens = jnp.take(lengths, perm, axis=0)
        sorted_x = jnp.take(word_vecs, perm, axis=0)                  # (B, T, D)

        t_idx = jnp.arange(self.seq_len, dtype=sorted_lens.dtype)
        valid = (t_idx[:, None] < sorted_lens[None, :]).astype(jnp.float32)
        # torch.mean over pad_packed output divides by this batch's max length.
        inv_max = 1.0 / jnp.max(sorted_lens).astype(jnp.float32)
        mask = valid * inv_max                                        # (T, B)

        x_tm = jnp.transpose(sorted_x, (1, 0, 2))                     # (T, B, D)
        return x_tm, mask

    def forward(self, question_id, user_ids, answer_ids, vote_scores):
        del vote_scores  # unused by the PyTorch forward as well
        xq, mq = self._prep_half(question_id)       # (T, B, D), (T, B)
        xa, ma = self._prep_half(answer_ids)

        x_tm = jnp.concatenate([xq, xa], axis=1)    # (T, 2B, D)
        mask = jnp.concatenate([mq, ma], axis=1)    # (T, 2B)
        T, B2, D = x_tm.shape
        B = B2 // 2
        H = self.hidden
        x_flat = x_tm.reshape(T * B2, D)            # (T*2B, D)
        # Pre-broadcast the mask to H lanes (no in-kernel lane broadcast and no
        # (T*2B, 1) lane-padded layout).
        mask_bc = jnp.broadcast_to(mask[:, :, None],
                                   (T, B2, H)).reshape(T * B2, H)

        user_vec = jnp.take(self.user_embed, user_ids, axis=0)        # (B, H)
        u_t = user_vec.T                                               # (H, B)
        L = 4 * H
        params = jnp.concatenate(
            [self.params_static, _pad_block(u_t, _round8(H), L)], axis=0)

        return amrnl_fused(x_flat, mask_bc, params, B=B, T=T, D=D, H=H)


if __name__ == "__main__":
    key = jax.random.PRNGKey(0)
    k_model, k_q, k_a, k_u, k_v = jax.random.split(key, 5)

    B = 8
    model = AMRNLPallas(k_model, n_content=20, seq_len=8, vocab=50,
                        embed_dim=32, hidden=32, user_size=10)

    question_id = jax.random.randint(k_q, (B,), 0, 20)
    answer_ids = jax.random.randint(k_a, (B,), 0, 20)
    user_ids = jax.random.randint(k_u, (B,), 0, 10)
    vote_scores = jax.random.uniform(k_v, (B,), jnp.float32)

    loss = jax.jit(model.forward)(question_id, user_ids, answer_ids, vote_scores)
    jax.block_until_ready(loss)
    assert loss.shape == () and jnp.isfinite(loss)
    print("KERNEL_OK")
</pallas_src>

<mosaic_0001>
module attributes {stable_mosaic.version = 11 : i64} {
  func.func @amrnl_fused_kernel(%arg0: memref<128x32xf32, #tpu.memory_space<vmem>>, %arg1: memref<128x32xf32, #tpu.memory_space<vmem>>, %arg2: memref<120x128xf32, #tpu.memory_space<vmem>>, %arg3: memref<1x1xf32, #tpu.memory_space<smem>>) attributes {dimension_semantics = [], scalar_prefetch = 0 : i64, scratch_operands = 0 : i64, tpu.core_type = #tpu.core_type<tc>} {
    %c0 = arith.constant 0 : index
    %c0_0 = arith.constant 0 : index
    %0 = vector.load %arg2[%c0, %c0_0] : memref<120x128xf32, #tpu.memory_space<vmem>>, vector<32x128xf32>
    %1 = arith.truncf %0 : vector<32x128xf32> to vector<32x128xbf16>
    %c32 = arith.constant 32 : index
    %c0_1 = arith.constant 0 : index
    %2 = vector.load %arg2[%c32, %c0_1] : memref<120x128xf32, #tpu.memory_space<vmem>>, vector<32x128xf32>
    %3 = arith.truncf %2 : vector<32x128xf32> to vector<32x128xbf16>
    %c64 = arith.constant 64 : index
    %c0_2 = arith.constant 0 : index
    %4 = vector.load %arg2[%c64, %c0_2] : memref<120x128xf32, #tpu.memory_space<vmem>>, vector<1x128xf32>
    %c0_3 = arith.constant 0 : index
    %c0_4 = arith.constant 0 : index
    %5 = vector.load %arg0[%c0_3, %c0_4] : memref<128x32xf32, #tpu.memory_space<vmem>>, vector<128x32xf32>
    %6 = arith.truncf %5 : vector<128x32xf32> to vector<128x32xbf16>
    %cst = arith.constant dense<0.000000e+00> : vector<128x128xf32>
    %7 = tpu.matmul %6, %1, %cst {dimension_numbers = #tpu.dot_dimension_numbers<[1], [0], [0], [1], [0, 0, 1, 1], [], []>} : vector<128x32xbf16>, vector<32x128xbf16>, vector<128x128xf32> -> vector<128x128xf32>
    %8 = vector.broadcast %4 : vector<1x128xf32> to vector<128x128xf32>
    %9 = arith.addf %7, %8 : vector<128x128xf32>
    %10 = tpu.iota {dimensions = array<i32: 1>} : vector<16x128xi32>
    %c64_i32 = arith.constant 64 : i32
    %11 = vector.broadcast %c64_i32 : i32 to vector<16x128xi32>
    %12 = arith.cmpi sge, %10, %11 : vector<16x128xi32>
    %c96_i32 = arith.constant 96 : i32
    %13 = vector.broadcast %c96_i32 : i32 to vector<16x128xi32>
    %14 = arith.cmpi slt, %10, %13 : vector<16x128xi32>
    %15 = arith.andi %12, %14 : vector<16x128xi1>
    %cst_5 = arith.constant 1.000000e+00 : f32
    %cst_6 = arith.constant 5.000000e-01 : f32
    %16 = vector.broadcast %cst_5 : f32 to vector<16x128xf32>
    %17 = vector.broadcast %cst_6 : f32 to vector<16x128xf32>
    %18 = arith.select %15, %16, %17 : vector<16x128xi1>, vector<16x128xf32>
    %cst_7 = arith.constant 0.000000e+00 : f32
    %cst_8 = arith.constant 5.000000e-01 : f32
    %19 = vector.broadcast %cst_7 : f32 to vector<16x128xf32>
    %20 = vector.broadcast %cst_8 : f32 to vector<16x128xf32>
    %21 = arith.select %15, %19, %20 : vector<16x128xi1>, vector<16x128xf32>
    %cst_9 = arith.constant 0.000000e+00 : f32
    %22 = vector.broadcast %cst_9 : f32 to vector<16x32xf32>
    %cst_10 = arith.constant 0.000000e+00 : f32
    %23 = vector.broadcast %cst_10 : f32 to vector<16x32xf32>
    %cst_11 = arith.constant 0.000000e+00 : f32
    %24 = vector.broadcast %cst_11 : f32 to vector<16x32xf32>
    %25 = vector.extract_strided_slice %9 {offsets = [0, 0], sizes = [16, 128], strides = [1, 1]} : vector<128x128xf32> to vector<16x128xf32>
    %26 = arith.truncf %22 : vector<16x32xf32> to vector<16x32xbf16>
    %cst_12 = arith.constant dense<0.000000e+00> : vector<16x128xf32>
    %27 = tpu.matmul %26, %3, %cst_12 {dimension_numbers = #tpu.dot_dimension_numbers<[1], [0], [0], [1], [0, 0, 1, 1], [], []>} : vector<16x32xbf16>, vector<32x128xbf16>, vector<16x128xf32> -> vector<16x128xf32>
    %28 = arith.addf %25, %27 : vector<16x128xf32>
    %29 = arith.mulf %28, %18 : vector<16x128xf32>
    %30 = math.tanh %29 : vector<16x128xf32>
    %31 = arith.mulf %30, %18 : vector<16x128xf32>
    %32 = arith.addf %31, %21 : vector<16x128xf32>
    %33 = vector.extract_strided_slice %32 {offsets = [0, 0], sizes = [16, 32], strides = [1, 1]} : vector<16x128xf32> to vector<16x32xf32>
    %34 = vector.extract_strided_slice %32 {offsets = [0, 32], sizes = [16, 32], strides = [1, 1]} : vector<16x128xf32> to vector<16x32xf32>
    %35 = vector.extract_strided_slice %32 {offsets = [0, 64], sizes = [16, 32], strides = [1, 1]} : vector<16x128xf32> to vector<16x32xf32>
    %36 = vector.extract_strided_slice %32 {offsets = [0, 96], sizes = [16, 32], strides = [1, 1]} : vector<16x128xf32> to vector<16x32xf32>
    %37 = arith.mulf %34, %23 : vector<16x32xf32>
    %38 = arith.mulf %33, %35 : vector<16x32xf32>
    %39 = arith.addf %37, %38 : vector<16x32xf32>
    %40 = math.tanh %39 : vector<16x32xf32>
    %41 = arith.mulf %36, %40 : vector<16x32xf32>
    %c0_13 = arith.constant 0 : index
    %c0_14 = arith.constant 0 : index
    %42 = vector.load %arg1[%c0_13, %c0_14] : memref<128x32xf32, #tpu.memory_space<vmem>>, vector<16x32xf32>
    %43 = arith.mulf %42, %41 : vector<16x32xf32>
    %44 = arith.addf %24, %43 : vector<16x32xf32>
    %45 = vector.extract_strided_slice %9 {offsets = [16, 0], sizes = [16, 128], strides = [1, 1]} : vector<128x128xf32> to vector<16x128xf32>
    %46 = arith.truncf %41 : vector<16x32xf32> to vector<16x32xbf16>
    %cst_15 = arith.constant dense<0.000000e+00> : vector<16x128xf32>
    %47 = tpu.matmul %46, %3, %cst_15 {dimension_numbers = #tpu.dot_dimension_numbers<[1], [0], [0], [1], [0, 0, 1, 1], [], []>} : vector<16x32xbf16>, vector<32x128xbf16>, vector<16x128xf32> -> vector<16x128xf32>
    %48 = arith.addf %45, %47 : vector<16x128xf32>
    %49 = arith.mulf %48, %18 : vector<16x128xf32>
    %50 = math.tanh %49 : vector<16x128xf32>
    %51 = arith.mulf %50, %18 : vector<16x128xf32>
    %52 = arith.addf %51, %21 : vector<16x128xf32>
    %53 = vector.extract_strided_slice %52 {offsets = [0, 0], sizes = [16, 32], strides = [1, 1]} : vector<16x128xf32> to vector<16x32xf32>
    %54 = vector.extract_strided_slice %52 {offsets = [0, 32], sizes = [16, 32], strides = [1, 1]} : vector<16x128xf32> to vector<16x32xf32>
    %55 = vector.extract_strided_slice %52 {offsets = [0, 64], sizes = [16, 32], strides = [1, 1]} : vector<16x128xf32> to vector<16x32xf32>
    %56 = vector.extract_strided_slice %52 {offsets = [0, 96], sizes = [16, 32], strides = [1, 1]} : vector<16x128xf32> to vector<16x32xf32>
    %57 = arith.mulf %54, %39 : vector<16x32xf32>
    %58 = arith.mulf %53, %55 : vector<16x32xf32>
    %59 = arith.addf %57, %58 : vector<16x32xf32>
    %60 = math.tanh %59 : vector<16x32xf32>
    %61 = arith.mulf %56, %60 : vector<16x32xf32>
    %c16 = arith.constant 16 : index
    %c0_16 = arith.constant 0 : index
    %62 = vector.load %arg1[%c16, %c0_16] : memref<128x32xf32, #tpu.memory_space<vmem>>, vector<16x32xf32>
    %63 = arith.mulf %62, %61 : vector<16x32xf32>
    %64 = arith.addf %44, %63 : vector<16x32xf32>
    %65 = vector.extract_strided_slice %9 {offsets = [32, 0], sizes = [16, 128], strides = [1, 1]} : vector<128x128xf32> to vector<16x128xf32>
    %66 = arith.truncf %61 : vector<16x32xf32> to vector<16x32xbf16>
    %cst_17 = arith.constant dense<0.000000e+00> : vector<16x128xf32>
    %67 = tpu.matmul %66, %3, %cst_17 {dimension_numbers = #tpu.dot_dimension_numbers<[1], [0], [0], [1], [0, 0, 1, 1], [], []>} : vector<16x32xbf16>, vector<32x128xbf16>, vector<16x128xf32> -> vector<16x128xf32>
    %68 = arith.addf %65, %67 : vector<16x128xf32>
    %69 = arith.mulf %68, %18 : vector<16x128xf32>
    %70 = math.tanh %69 : vector<16x128xf32>
    %71 = arith.mulf %70, %18 : vector<16x128xf32>
    %72 = arith.addf %71, %21 : vector<16x128xf32>
    %73 = vector.extract_strided_slice %72 {offsets = [0, 0], sizes = [16, 32], strides = [1, 1]} : vector<16x128xf32> to vector<16x32xf32>
    %74 = vector.extract_strided_slice %72 {offsets = [0, 32], sizes = [16, 32], strides = [1, 1]} : vector<16x128xf32> to vector<16x32xf32>
    %75 = vector.extract_strided_slice %72 {offsets = [0, 64], sizes = [16, 32], strides = [1, 1]} : vector<16x128xf32> to vector<16x32xf32>
    %76 = vector.extract_strided_slice %72 {offsets = [0, 96], sizes = [16, 32], strides = [1, 1]} : vector<16x128xf32> to vector<16x32xf32>
    %77 = arith.mulf %74, %59 : vector<16x32xf32>
    %78 = arith.mulf %73, %75 : vector<16x32xf32>
    %79 = arith.addf %77, %78 : vector<16x32xf32>
    %80 = math.tanh %79 : vector<16x32xf32>
    %81 = arith.mulf %76, %80 : vector<16x32xf32>
    %c32_18 = arith.constant 32 : index
    %c0_19 = arith.constant 0 : index
    %82 = vector.load %arg1[%c32_18, %c0_19] : memref<128x32xf32, #tpu.memory_space<vmem>>, vector<16x32xf32>
    %83 = arith.mulf %82, %81 : vector<16x32xf32>
    %84 = arith.addf %64, %83 : vector<16x32xf32>
    %85 = vector.extract_strided_slice %9 {offsets = [48, 0], sizes = [16, 128], strides = [1, 1]} : vector<128x128xf32> to vector<16x128xf32>
    %86 = arith.truncf %81 : vector<16x32xf32> to vector<16x32xbf16>
    %cst_20 = arith.constant dense<0.000000e+00> : vector<16x128xf32>
    %87 = tpu.matmul %86, %3, %cst_20 {dimension_numbers = #tpu.dot_dimension_numbers<[1], [0], [0], [1], [0, 0, 1, 1], [], []>} : vector<16x32xbf16>, vector<32x128xbf16>, vector<16x128xf32> -> vector<16x128xf32>
    %88 = arith.addf %85, %87 : vector<16x128xf32>
    %89 = arith.mulf %88, %18 : vector<16x128xf32>
    %90 = math.tanh %89 : vector<16x128xf32>
    %91 = arith.mulf %90, %18 : vector<16x128xf32>
    %92 = arith.addf %91, %21 : vector<16x128xf32>
    %93 = vector.extract_strided_slice %92 {offsets = [0, 0], sizes = [16, 32], strides = [1, 1]} : vector<16x128xf32> to vector<16x32xf32>
    %94 = vector.extract_strided_slice %92 {offsets = [0, 32], sizes = [16, 32], strides = [1, 1]} : vector<16x128xf32> to vector<16x32xf32>
    %95 = vector.extract_strided_slice %92 {offsets = [0, 64], sizes = [16, 32], strides = [1, 1]} : vector<16x128xf32> to vector<16x32xf32>
    %96 = vector.extract_strided_slice %92 {offsets = [0, 96], sizes = [16, 32], strides = [1, 1]} : vector<16x128xf32> to vector<16x32xf32>
    %97 = arith.mulf %94, %79 : vector<16x32xf32>
    %98 = arith.mulf %93, %95 : vector<16x32xf32>
    %99 = arith.addf %97, %98 : vector<16x32xf32>
    %100 = math.tanh %99 : vector<16x32xf32>
    %101 = arith.mulf %96, %100 : vector<16x32xf32>
    %c48 = arith.constant 48 : index
    %c0_21 = arith.constant 0 : index
    %102 = vector.load %arg1[%c48, %c0_21] : memref<128x32xf32, #tpu.memory_space<vmem>>, vector<16x32xf32>
    %103 = arith.mulf %102, %101 : vector<16x32xf32>
    %104 = arith.addf %84, %103 : vector<16x32xf32>
    %105 = vector.extract_strided_slice %9 {offsets = [64, 0], sizes = [16, 128], strides = [1, 1]} : vector<128x128xf32> to vector<16x128xf32>
    %106 = arith.truncf %101 : vector<16x32xf32> to vector<16x32xbf16>
    %cst_22 = arith.constant dense<0.000000e+00> : vector<16x128xf32>
    %107 = tpu.matmul %106, %3, %cst_22 {dimension_numbers = #tpu.dot_dimension_numbers<[1], [0], [0], [1], [0, 0, 1, 1], [], []>} : vector<16x32xbf16>, vector<32x128xbf16>, vector<16x128xf32> -> vector<16x128xf32>
    %108 = arith.addf %105, %107 : vector<16x128xf32>
    %109 = arith.mulf %108, %18 : vector<16x128xf32>
    %110 = math.tanh %109 : vector<16x128xf32>
    %111 = arith.mulf %110, %18 : vector<16x128xf32>
    %112 = arith.addf %111, %21 : vector<16x128xf32>
    %113 = vector.extract_strided_slice %112 {offsets = [0, 0], sizes = [16, 32], strides = [1, 1]} : vector<16x128xf32> to vector<16x32xf32>
    %114 = vector.extract_strided_slice %112 {offsets = [0, 32], sizes = [16, 32], strides = [1, 1]} : vector<16x128xf32> to vector<16x32xf32>
    %115 = vector.extract_strided_slice %112 {offsets = [0, 64], sizes = [16, 32], strides = [1, 1]} : vector<16x128xf32> to vector<16x32xf32>
    %116 = vector.extract_strided_slice %112 {offsets = [0, 96], sizes = [16, 32], strides = [1, 1]} : vector<16x128xf32> to vector<16x32xf32>
    %117 = arith.mulf %114, %99 : vector<16x32xf32>
    %118 = arith.mulf %113, %115 : vector<16x32xf32>
    %119 = arith.addf %117, %118 : vector<16x32xf32>
    %120 = math.tanh %119 : vector<16x32xf32>
    %121 = arith.mulf %116, %120 : vector<16x32xf32>
    %c64_23 = arith.constant 64 : index
    %c0_24 = arith.constant 0 : index
    %122 = vector.load %arg1[%c64_23, %c0_24] : memref<128x32xf32, #tpu.memory_space<vmem>>, vector<16x32xf32>
    %123 = arith.mulf %122, %121 : vector<16x32xf32>
    %124 = arith.addf %104, %123 : vector<16x32xf32>
    %125 = vector.extract_strided_slice %9 {offsets = [80, 0], sizes = [16, 128], strides = [1, 1]} : vector<128x128xf32> to vector<16x128xf32>
    %126 = arith.truncf %121 : vector<16x32xf32> to vector<16x32xbf16>
    %cst_25 = arith.constant dense<0.000000e+00> : vector<16x128xf32>
    %127 = tpu.matmul %126, %3, %cst_25 {dimension_numbers = #tpu.dot_dimension_numbers<[1], [0], [0], [1], [0, 0, 1, 1], [], []>} : vector<16x32xbf16>, vector<32x128xbf16>, vector<16x128xf32> -> vector<16x128xf32>
    %128 = arith.addf %125, %127 : vector<16x128xf32>
    %129 = arith.mulf %128, %18 : vector<16x128xf32>
    %130 = math.tanh %129 : vector<16x128xf32>
    %131 = arith.mulf %130, %18 : vector<16x128xf32>
    %132 = arith.addf %131, %21 : vector<16x128xf32>
    %133 = vector.extract_strided_slice %132 {offsets = [0, 0], sizes = [16, 32], strides = [1, 1]} : vector<16x128xf32> to vector<16x32xf32>
    %134 = vector.extract_strided_slice %132 {offsets = [0, 32], sizes = [16, 32], strides = [1, 1]} : vector<16x128xf32> to vector<16x32xf32>
    %135 = vector.extract_strided_slice %132 {offsets = [0, 64], sizes = [16, 32], strides = [1, 1]} : vector<16x128xf32> to vector<16x32xf32>
    %136 = vector.extract_strided_slice %132 {offsets = [0, 96], sizes = [16, 32], strides = [1, 1]} : vector<16x128xf32> to vector<16x32xf32>
    %137 = arith.mulf %134, %119 : vector<16x32xf32>
    %138 = arith.mulf %133, %135 : vector<16x32xf32>
    %139 = arith.addf %137, %138 : vector<16x32xf32>
    %140 = math.tanh %139 : vector<16x32xf32>
    %141 = arith.mulf %136, %140 : vector<16x32xf32>
    %c80 = arith.constant 80 : index
    %c0_26 = arith.constant 0 : index
    %142 = vector.load %arg1[%c80, %c0_26] : memref<128x32xf32, #tpu.memory_space<vmem>>, vector<16x32xf32>
    %143 = arith.mulf %142, %141 : vector<16x32xf32>
    %144 = arith.addf %124, %143 : vector<16x32xf32>
    %145 = vector.extract_strided_slice %9 {offsets = [96, 0], sizes = [16, 128], strides = [1, 1]} : vector<128x128xf32> to vector<16x128xf32>
    %146 = arith.truncf %141 : vector<16x32xf32> to vector<16x32xbf16>
    %cst_27 = arith.constant dense<0.000000e+00> : vector<16x128xf32>
    %147 = tpu.matmul %146, %3, %cst_27 {dimension_numbers = #tpu.dot_dimension_numbers<[1], [0], [0], [1], [0, 0, 1, 1], [], []>} : vector<16x32xbf16>, vector<32x128xbf16>, vector<16x128xf32> -> vector<16x128xf32>
    %148 = arith.addf %145, %147 : vector<16x128xf32>
    %149 = arith.mulf %148, %18 : vector<16x128xf32>
    %150 = math.tanh %149 : vector<16x128xf32>
    %151 = arith.mulf %150, %18 : vector<16x128xf32>
    %152 = arith.addf %151, %21 : vector<16x128xf32>
    %153 = vector.extract_strided_slice %152 {offsets = [0, 0], sizes = [16, 32], strides = [1, 1]} : vector<16x128xf32> to vector<16x32xf32>
    %154 = vector.extract_strided_slice %152 {offsets = [0, 32], sizes = [16, 32], strides = [1, 1]} : vector<16x128xf32> to vector<16x32xf32>
    %155 = vector.extract_strided_slice %152 {offsets = [0, 64], sizes = [16, 32], strides = [1, 1]} : vector<16x128xf32> to vector<16x32xf32>
    %156 = vector.extract_strided_slice %152 {offsets = [0, 96], sizes = [16, 32], strides = [1, 1]} : vector<16x128xf32> to vector<16x32xf32>
    %157 = arith.mulf %154, %139 : vector<16x32xf32>
    %158 = arith.mulf %153, %155 : vector<16x32xf32>
    %159 = arith.addf %157, %158 : vector<16x32xf32>
    %160 = math.tanh %159 : vector<16x32xf32>
    %161 = arith.mulf %156, %160 : vector<16x32xf32>
    %c96 = arith.constant 96 : index
    %c0_28 = arith.constant 0 : index
    %162 = vector.load %arg1[%c96, %c0_28] : memref<128x32xf32, #tpu.memory_space<vmem>>, vector<16x32xf32>
    %163 = arith.mulf %162, %161 : vector<16x32xf32>
    %164 = arith.addf %144, %163 : vector<16x32xf32>
    %165 = vector.extract_strided_slice %9 {offsets = [112, 0], sizes = [16, 128], strides = [1, 1]} : vector<128x128xf32> to vector<16x128xf32>
    %166 = arith.truncf %161 : vector<16x32xf32> to vector<16x32xbf16>
    %cst_29 = arith.constant dense<0.000000e+00> : vector<16x128xf32>
    %167 = tpu.matmul %166, %3, %cst_29 {dimension_numbers = #tpu.dot_dimension_numbers<[1], [0], [0], [1], [0, 0, 1, 1], [], []>} : vector<16x32xbf16>, vector<32x128xbf16>, vector<16x128xf32> -> vector<16x128xf32>
    %168 = arith.addf %165, %167 : vector<16x128xf32>
    %169 = arith.mulf %168, %18 : vector<16x128xf32>
    %170 = math.tanh %169 : vector<16x128xf32>
    %171 = arith.mulf %170, %18 : vector<16x128xf32>
    %172 = arith.addf %171, %21 : vector<16x128xf32>
    %173 = vector.extract_strided_slice %172 {offsets = [0, 0], sizes = [16, 32], strides = [1, 1]} : vector<16x128xf32> to vector<16x32xf32>
    %174 = vector.extract_strided_slice %172 {offsets = [0, 32], sizes = [16, 32], strides = [1, 1]} : vector<16x128xf32> to vector<16x32xf32>
    %175 = vector.extract_strided_slice %172 {offsets = [0, 64], sizes = [16, 32], strides = [1, 1]} : vector<16x128xf32> to vector<16x32xf32>
    %176 = vector.extract_strided_slice %172 {offsets = [0, 96], sizes = [16, 32], strides = [1, 1]} : vector<16x128xf32> to vector<16x32xf32>
    %177 = arith.mulf %174, %159 : vector<16x32xf32>
    %178 = arith.mulf %173, %175 : vector<16x32xf32>
    %179 = arith.addf %177, %178 : vector<16x32xf32>
    %180 = math.tanh %179 : vector<16x32xf32>
    %181 = arith.mulf %176, %180 : vector<16x32xf32>
    %c112 = arith.constant 112 : index
    %c0_30 = arith.constant 0 : index
    %182 = vector.load %arg1[%c112, %c0_30] : memref<128x32xf32, #tpu.memory_space<vmem>>, vector<16x32xf32>
    %183 = arith.mulf %182, %181 : vector<16x32xf32>
    %184 = arith.addf %164, %183 : vector<16x32xf32>
    %185 = vector.extract_strided_slice %184 {offsets = [0, 0], sizes = [8, 32], strides = [1, 1]} : vector<16x32xf32> to vector<8x32xf32>
    %186 = math.tanh %185 : vector<8x32xf32>
    %187 = vector.extract_strided_slice %184 {offsets = [8, 0], sizes = [8, 32], strides = [1, 1]} : vector<16x32xf32> to vector<8x32xf32>
    %cst_31 = arith.constant 0.000000e+00 : f32
    %188 = vector.broadcast %cst_31 : f32 to vector<8x32xf32>
    %189 = arith.maximumf %187, %188 : vector<8x32xf32>
    %cst_32 = arith.constant dense<0.000000e+00> : vector<32xf32>
    %190 = vector.multi_reduction <add>, %189, %cst_32 [0] : vector<8x32xf32> to vector<32xf32>
    %191 = vector.shape_cast %190 : vector<32xf32> to vector<1x32xf32>
    %cst_33 = arith.constant 8.000000e+00 : f32
    %192 = vector.broadcast %cst_33 : f32 to vector<1x32xf32>
    %193 = arith.divf %191, %192 : vector<1x32xf32>
    %194 = vector.broadcast %193 : vector<1x32xf32> to vector<8x32xf32>
    %195 = arith.subf %189, %194 : vector<8x32xf32>
    %196 = arith.mulf %195, %195 : vector<8x32xf32>
    %cst_34 = arith.constant dense<0.000000e+00> : vector<32xf32>
    %197 = vector.multi_reduction <add>, %196, %cst_34 [0] : vector<8x32xf32> to vector<32xf32>
    %198 = vector.shape_cast %197 : vector<32xf32> to vector<1x32xf32>
    %cst_35 = arith.constant 8.000000e+00 : f32
    %199 = vector.broadcast %cst_35 : f32 to vector<1x32xf32>
    %200 = arith.divf %198, %199 : vector<1x32xf32>
    %c72 = arith.constant 72 : index
    %c0_36 = arith.constant 0 : index
    %201 = vector.load %arg2[%c72, %c0_36] : memref<120x128xf32, #tpu.memory_space<vmem>>, vector<1x32xf32>
    %c80_37 = arith.constant 80 : index
    %c0_38 = arith.constant 0 : index
    %202 = vector.load %arg2[%c80_37, %c0_38] : memref<120x128xf32, #tpu.memory_space<vmem>>, vector<1x32xf32>
    %cst_39 = arith.constant 9.99999974E-6 : f32
    %203 = vector.broadcast %cst_39 : f32 to vector<1x32xf32>
    %204 = arith.addf %200, %203 : vector<1x32xf32>
    %205 = math.rsqrt %204 : vector<1x32xf32>
    %206 = vector.broadcast %205 : vector<1x32xf32> to vector<8x32xf32>
    %207 = arith.mulf %195, %206 : vector<8x32xf32>
    %208 = vector.broadcast %201 : vector<1x32xf32> to vector<8x32xf32>
    %209 = arith.mulf %207, %208 : vector<8x32xf32>
    %210 = vector.broadcast %202 : vector<1x32xf32> to vector<8x32xf32>
    %211 = arith.addf %209, %210 : vector<8x32xf32>
    %c88 = arith.constant 88 : index
    %c0_40 = arith.constant 0 : index
    %212 = vector.load %arg2[%c88, %c0_40] : memref<120x128xf32, #tpu.memory_space<vmem>>, vector<32x8xf32>
    %cst_41 = arith.constant dense<0.000000e+00> : vector<8x8xf32>
    %213 = tpu.matmul %186, %211, %cst_41 {dimension_numbers = #tpu.dot_dimension_numbers<[1], [1], [0], [0], [0, 0, 1, 0], [], []>} : vector<8x32xf32>, vector<8x32xf32>, vector<8x8xf32> -> vector<8x8xf32>
    %cst_42 = arith.constant dense<0.000000e+00> : vector<8x8xf32>
    %214 = tpu.matmul %186, %212, %cst_42 {dimension_numbers = #tpu.dot_dimension_numbers<[1], [0], [0], [1], [0, 0, 1, 1], [], []>} : vector<8x32xf32>, vector<32x8xf32>, vector<8x8xf32> -> vector<8x8xf32>
    %215 = arith.mulf %213, %214 : vector<8x8xf32>
    %216 = vector.extract_strided_slice %215 {offsets = [0, 0], sizes = [1, 8], strides = [1, 1]} : vector<8x8xf32> to vector<1x8xf32>
    %217 = vector.broadcast %216 : vector<1x8xf32> to vector<8x8xf32>
    %218 = arith.subf %215, %217 : vector<8x8xf32>
    %cst_43 = arith.constant 1.000000e-03 : f32
    %219 = vector.broadcast %cst_43 : f32 to vector<8x8xf32>
    %220 = arith.addf %218, %219 : vector<8x8xf32>
    %cst_44 = arith.constant 0.000000e+00 : f32
    %221 = vector.broadcast %cst_44 : f32 to vector<8x8xf32>
    %222 = arith.maximumf %220, %221 : vector<8x8xf32>
    %223 = vector.shape_cast %222 : vector<8x8xf32> to vector<1x8x8xf32>
    %cst_45 = arith.constant dense<0.000000e+00> : vector<1xf32>
    %224 = vector.multi_reduction <add>, %223, %cst_45 [1, 2] : vector<1x8x8xf32> to vector<1xf32>
    %225 = vector.shape_cast %224 : vector<1xf32> to vector<1x1x1xf32>
    %226 = vector.extract %225[0, 0, 0] : f32 from vector<1x1x1xf32>
    %c0_46 = arith.constant 0 : index
    %c0_47 = arith.constant 0 : index
    %227 = memref.load %arg3[%c0_46, %c0_47] : memref<1x1xf32, #tpu.memory_space<smem>>
    memref.store %226, %arg3[%c0_46, %c0_47] : memref<1x1xf32, #tpu.memory_space<smem>>
    return
  }
}

</mosaic_0001>

<llo_original>
// kernel: forward.1
$region0: #{forward.1}
  #allocation0 [shape = 'u32[]', space=smem, size = 0x4, offset = 0x4, fixed_abs, tag = 'smem constant byte address 0x4 - core index']
  #allocation1 [shape = 'u32[144,128]{1,0:T(1,128)}', space=vmem, size = 0x12000, scoped, tag = 'internal scratch']
  %s0 = inlined_call_operand.vmem [shape: f32[128,32], index: 0, kind: input, shape index: {}]
  %s1 = inlined_call_operand.vmem [shape: f32[128,32], index: 1, kind: input, shape index: {}]
  %s2 = inlined_call_operand.vmem [shape: f32[120,128], index: 2, kind: input, shape index: {}]
  %s3 = inlined_call_operand.hbm [shape: f32[1,1], index: 3, kind: output, shape index: {}]
  %s4 = sld [smem:[#allocation0]]
  $region22: #{forward.1} parent=0
    _
  %s6 = ssub.s32 1, %s4
  %s7 = scalar_select 0, %s6, %s4
  $region1: #{forward.1} parent=0
    #allocation2 [shape = 'u8[512]{0}', space=smem, size = 0x200, scoped, tag = 'output window, operand 0, single buffered']
    #allocation3 [shape = 's32[1]{0}', space=sflag, size = 0x4, scoped, tag = 'scoped memory for forward.1']
    %8 = vsyncpa [#allocation3], 0
    // Predicated region
    $region2: #{forward.1} parent=1 // pred_check
      _
    $region3: #{forward.1} parent=1 // pred_check_branch
      %10 = sbr.rel (0) target = $region5
    $region4: #{forward.1} parent=1 // pred_region
      _
    $region5: #{forward.1} parent=1 // pred_fallthru
      _
    // Predicated region
    $region6: #{forward.1} parent=1 // pred_check
      _
    $region7: #{forward.1} parent=1 // pred_check_branch
      %12 = sbr.rel (0) target = $region9
    $region8: #{forward.1} parent=1 // pred_region
      _
    $region9: #{forward.1} parent=1 // pred_fallthru
      _
    // Predicated region
    $region10: #{forward.1} parent=1 // pred_check
      _
    $region11: #{forward.1} parent=1 // pred_check_branch
      %14 = sbr.rel (0) target = $region13
    $region12: #{forward.1} parent=1 // pred_region
      _
    $region13: #{forward.1} parent=1 // pred_fallthru
      _
    %v16 = vld [vmem:[%s2] sm:$0xff]
    %v17 = vld [vmem:[%s2 + $0x8] sm:$0xff]
    %v18 = vld [vmem:[%s2 + $0x10] sm:$0xff]
    %v19 = vld [vmem:[%s2 + $0x18] sm:$0xff]
    %v20 = vpack.c.bf16 %v17, %v16
    %v21 = vpack.c.bf16 %v19, %v18
    %v22 = vld [vmem:[%s2 + $0x20] sm:$0xff]
    %v23 = vld [vmem:[%s2 + $0x28] sm:$0xff]
    %v24 = vld [vmem:[%s2 + $0x30] sm:$0xff]
    %v25 = vld [vmem:[%s2 + $0x38] sm:$0xff]
    %v26 = vpack.c.bf16 %v23, %v22
    %v27 = vpack.c.bf16 %v25, %v24
    %v28 = vld [vmem:[%s2 + $0x40] sm:$0x1]
    %v29 = vld [vmem:[%s0] sm:$0xff]
    %v30 = vld [vmem:[%s0 + $0x8] sm:$0xff]
    %v31 = vld [vmem:[%s0 + $0x10] sm:$0xff]
    %v32 = vld [vmem:[%s0 + $0x18] sm:$0xff]
    %v33 = vld [vmem:[%s0 + $0x20] sm:$0xff]
    %v34 = vld [vmem:[%s0 + $0x28] sm:$0xff]
    %v35 = vld [vmem:[%s0 + $0x30] sm:$0xff]
    %v36 = vld [vmem:[%s0 + $0x38] sm:$0xff]
    %v37 = vld [vmem:[%s0 + $0x40] sm:$0xff]
    %v38 = vld [vmem:[%s0 + $0x48] sm:$0xff]
    %v39 = vld [vmem:[%s0 + $0x50] sm:$0xff]
    %v40 = vld [vmem:[%s0 + $0x58] sm:$0xff]
    %v41 = vld [vmem:[%s0 + $0x60] sm:$0xff]
    %v42 = vld [vmem:[%s0 + $0x68] sm:$0xff]
    %v43 = vld [vmem:[%s0 + $0x70] sm:$0xff]
    %v44 = vld [vmem:[%s0 + $0x78] sm:$0xff]
    %v45 = vpack.c.bf16 %v30, %v29
    %v46 = vpack.c.bf16 %v32, %v31
    %v47 = vpack.c.bf16 %v34, %v33
    %v48 = vpack.c.bf16 %v36, %v35
    %v49 = vpack.c.bf16 %v38, %v37
    %v50 = vpack.c.bf16 %v40, %v39
    %v51 = vpack.c.bf16 %v42, %v41
    %v52 = vpack.c.bf16 %v44, %v43
    %v53 = vlaneseq
    %v54 = vshrl.u32 %v53, 7
    %v55 = vsub.s32 0, %v54
    %v56 = vrot.slane %v28, %v55
    %vm57 = vcmask 261120
    %v59 = vsel %vm57, %v45, 0
    %v62 = vsel %vm57, %v46, 0
    %v65 = vsel %vm57, %v47, 0
    %v68 = vsel %vm57, %v48, 0
    %v71 = vsel %vm57, %v49, 0
    %v74 = vsel %vm57, %v50, 0
    %v77 = vsel %vm57, %v51, 0
    %v80 = vsel %vm57, %v52, 0
    %82 = vmatprep.subr.bf16.mxu0 0
    %83 = vmatpush1.bf16.msra.mxu0 %v20
    %84 = vmatprep.subr.bf16.mxu0 0
    %85 = vmatpush1.bf16.msra.mxu0 %v21
    %86 = vmatprep.subr.bf16.mxu0 0
    %87 = vmatpush1.bf16.msra.mxu0 0
    %88 = vmatprep.subr.bf16.mxu0 0
    %89 = vmatpush1.bf16.msra.mxu0 0
    %90 = vmatprep.subr.bf16.mxu0 0
    %91 = vmatpush1.bf16.msra.mxu0 0
    %92 = vmatprep.subr.bf16.mxu0 0
    %93 = vmatpush1.bf16.msra.mxu0 0
    %94 = vmatprep.subr.bf16.mxu0 0
    %95 = vmatpush1.bf16.msra.mxu0 0
    %96 = vmatprep.subr.bf16.mxu0 0
    %97 = vmatpush1.bf16.msra.mxu0 0
    %98 = vmatprep.subr.bf16.mxu0 0
    %99 = vmatpush1.bf16.msra.mxu0 0
    %100 = vmatprep.subr.bf16.mxu0 0
    %101 = vmatpush1.bf16.msra.mxu0 0
    %102 = vmatprep.subr.bf16.mxu0 0
    %103 = vmatpush1.bf16.msra.mxu0 0
    %104 = vmatprep.subr.bf16.mxu0 0
    %105 = vmatpush1.bf16.msra.mxu0 0
    %106 = vmatprep.subr.bf16.mxu0 0
    %107 = vmatpush1.bf16.msra.mxu0 0
    %108 = vmatprep.subr.bf16.mxu0 0
    %109 = vmatpush1.bf16.msra.mxu0 0
    %110 = vmatprep.subr.bf16.mxu0 0
    %111 = vmatpush1.bf16.msra.mxu0 0
    %112 = vmatprep.subr.bf16.mxu0 0
    %113 = vmatpush1.bf16.msra.mxu0 0
    %114 = vmatprep.mubr.bf16.mxu0 0
    %115 = vmatmul.mubr.bf16.gmra.mrb[0].mxu0 %v59
    %v116 = vpop.f32.mrb[0].mxu0
    %v117 = vadd.f32 %v56, %v116
    %v118 = vpop.f32.mrb[0].mxu0
    %v119 = vpop.f32.mrb[0].mxu0
    %v120 = vadd.f32 %v56, %v119
    %v121 = vpop.f32.mrb[0].mxu0
    %122 = vmatprep.mubr.bf16.mxu0 0
    %123 = vmatmul.mubr.bf16.gmra.mrb[0].mxu0 %v62
    %v124 = vpop.f32.mrb[0].mxu0
    %v125 = vadd.f32 %v56, %v124
    %v126 = vpop.f32.mrb[0].mxu0
    %v127 = vpop.f32.mrb[0].mxu0
    %v128 = vadd.f32 %v56, %v127
    %v129 = vpop.f32.mrb[0].mxu0
    %130 = vmatprep.mubr.bf16.mxu0 0
    %131 = vmatmul.mubr.bf16.gmra.mrb[0].mxu0 %v65
    %v132 = vpop.f32.mrb[0].mxu0
    %v133 = vadd.f32 %v56, %v132
    %v134 = vpop.f32.mrb[0].mxu0
    %v135 = vpop.f32.mrb[0].mxu0
    %v136 = vadd.f32 %v56, %v135
    %v137 = vpop.f32.mrb[0].mxu0
    %138 = vmatprep.mubr.bf16.mxu0 0
    %139 = vmatmul.mubr.bf16.gmra.mrb[0].mxu0 %v68
    %v140 = vpop.f32.mrb[0].mxu0
    %v141 = vadd.f32 %v56, %v140
    %v142 = vpop.f32.mrb[0].mxu0
    %v143 = vpop.f32.mrb[0].mxu0
    %v144 = vadd.f32 %v56, %v143
    %v145 = vpop.f32.mrb[0].mxu0
    %146 = vmatprep.mubr.bf16.mxu0 0
    %147 = vmatmul.mubr.bf16.gmra.mrb[0].mxu0 %v71
    %v148 = vpop.f32.mrb[0].mxu0
    %v149 = vadd.f32 %v56, %v148
    %v150 = vpop.f32.mrb[0].mxu0
    %v151 = vpop.f32.mrb[0].mxu0
    %v152 = vadd.f32 %v56, %v151
    %v153 = vpop.f32.mrb[0].mxu0
    %154 = vmatprep.mubr.bf16.mxu0 0
    %155 = vmatmul.mubr.bf16.gmra.mrb[0].mxu0 %v74
    %v156 = vpop.f32.mrb[0].mxu0
    %v157 = vadd.f32 %v56, %v156
    %v158 = vpop.f32.mrb[0].mxu0
    %v159 = vpop.f32.mrb[0].mxu0
    %v160 = vadd.f32 %v56, %v159
    %v161 = vpop.f32.mrb[0].mxu0
    %162 = vmatprep.mubr.bf16.mxu0 0
    %163 = vmatmul.mubr.bf16.gmra.mrb[0].mxu0 %v77
    %v164 = vpop.f32.mrb[0].mxu0
    %v165 = vadd.f32 %v56, %v164
    %v166 = vpop.f32.mrb[0].mxu0
    %v167 = vpop.f32.mrb[0].mxu0
    %v168 = vadd.f32 %v56, %v167
    %v169 = vpop.f32.mrb[0].mxu0
    %170 = vmatprep.mubr.bf16.mxu0 0
    %171 = vmatmul.mubr.bf16.gmra.mrb[0].mxu0 %v80
    %v172 = vpop.f32.mrb[0].mxu0
    %v173 = vadd.f32 %v56, %v172
    %v174 = vpop.f32.mrb[0].mxu0
    %v175 = vpop.f32.mrb[0].mxu0
    %v176 = vadd.f32 %v56, %v175
    %v177 = vpop.f32.mrb[0].mxu0
    %178 = vdwg.mxu0
    %v179 = vlaneseq
    %v180 = vand.u32 %v179, 127
    %vm181 = vcmp.ge.s32.totalorder %v180, 64
    %vm182 = vcmp.lt.s32.totalorder %v180, 96
    %vm183 = vmand %vm181, %vm182
    %v184 = vsel %vm183, 1.0, 0.5
    %v185 = vsel %vm183, 0.0, 0.5
    %v187 = vsel %vm57, 0, 0
    %189 = vmatprep.subr.bf16.mxu0 0
    %190 = vmatpush1.bf16.msra.mxu0 %v26
    %191 = vmatprep.subr.bf16.mxu0 0
    %192 = vmatpush1.bf16.msra.mxu0 %v27
    %193 = vmatprep.subr.bf16.mxu0 0
    %194 = vmatpush1.bf16.msra.mxu0 0
    %195 = vmatprep.subr.bf16.mxu0 0
    %196 = vmatpush1.bf16.msra.mxu0 0
    %197 = vmatprep.subr.bf16.mxu0 0
    %198 = vmatpush1.bf16.msra.mxu0 0
    %199 = vmatprep.subr.bf16.mxu0 0
    %200 = vmatpush1.bf16.msra.mxu0 0
    %201 = vmatprep.subr.bf16.mxu0 0
    %202 = vmatpush1.bf16.msra.mxu0 0
    %203 = vmatprep.subr.bf16.mxu0 0
    %204 = vmatpush1.bf16.msra.mxu0 0
    %205 = vmatprep.subr.bf16.mxu0 0
    %206 = vmatpush1.bf16.msra.mxu0 0
    %207 = vmatprep.subr.bf16.mxu0 0
    %208 = vmatpush1.bf16.msra.mxu0 0
    %209 = vmatprep.subr.bf16.mxu0 0
    %210 = vmatpush1.bf16.msra.mxu0 0
    %211 = vmatprep.subr.bf16.mxu0 0
    %212 = vmatpush1.bf16.msra.mxu0 0
    %213 = vmatprep.subr.bf16.mxu0 0
    %214 = vmatpush1.bf16.msra.mxu0 0
    %215 = vmatprep.subr.bf16.mxu0 0
    %216 = vmatpush1.bf16.msra.mxu0 0
    %217 = vmatprep.subr.bf16.mxu0 0
    %218 = vmatpush1.bf16.msra.mxu0 0
    %219 = vmatprep.subr.bf16.mxu0 0
    %220 = vmatpush1.bf16.msra.mxu0 0
    %221 = vmatprep.mubr.bf16.mxu0 0
    %222 = vmatmul.mubr.bf16.gmra.mrb[0].mxu0 %v187
    %v223 = vpop.f32.mrb[0].mxu0
    %v224 = vadd.f32 0.0, %v223
    %v225 = vpop.f32.mrb[0].mxu0
    %v226 = vpop.f32.mrb[0].mxu0
    %v227 = vadd.f32 0.0, %v226
    %v228 = vpop.f32.mrb[0].mxu0
    %229 = vdwg.mxu0
    %v230 = vadd.f32 %v117, %v224
    %v231 = vadd.f32 %v120, %v227
    %v232 = vmul.f32 %v230, %v184
    %v233 = vmul.f32 %v231, %v184
    %v234 = vtanh.pop %v232
    %v235 = vtanh.pop %v233
    %v236 = vmul.f32 %v234, %v184
    %v237 = vmul.f32 %v235, %v184
    %v238 = vadd.f32 %v236, %v185
    %v239 = vadd.f32 %v237, %v185
    %v240 = vmul.f32 %v238, 0.0
    %v241 = vmul.f32 %v239, 0.0
    %244 = vrot.lane.b32.xlu0 %v238, 64
    %v245 = vpop.permute.xlu0 %244
    %246 = vrot.lane.b32.xlu0 %v239, 64
    %v247 = vpop.permute.xlu0 %246
    %v250 = vmul.f32 %v238, %v245
    %v251 = vmul.f32 %v239, %v247
    %254 = vrot.lane.b32.xlu0 %v250, 32
    %v255 = vpop.permute.xlu0 %254
    %256 = vrot.lane.b32.xlu0 %v251, 32
    %v257 = vpop.permute.xlu0 %256
    %v260 = vadd.f32 %v240, %v255
    %v261 = vadd.f32 %v241, %v257
    %v262 = vtanh.pop %v260
    %v263 = vtanh.pop %v261
    %266 = vrot.lane.b32.xlu0 %v262, 64
    %v267 = vpop.permute.xlu0 %266
    %268 = vrot.lane.b32.xlu0 %v263, 64
    %v269 = vpop.permute.xlu0 %268
    %v272 = vmul.f32 %v238, %v267
    %v273 = vmul.f32 %v239, %v269
    %v274 = vld [vmem:[%s1] sm:$0xff]
    %v275 = vld [vmem:[%s1 + $0x8] sm:$0xff]
    %278 = vrot.lane.b32.xlu0 %v272, 32
    %v279 = vpop.permute.xlu0 %278
    %280 = vrot.lane.b32.xlu0 %v273, 32
    %v281 = vpop.permute.xlu0 %280
    %v284 = vmul.f32 %v274, %v279
    %v285 = vmul.f32 %v275, %v281
    %v286 = vadd.f32 %v284, 0.0
    %v287 = vadd.f32 %v285, 0.0
    %v288 = vpack.c.bf16 %v273, %v272
    %290 = vrot.lane.b32.xlu0 %v288, 32
    %v291 = vpop.permute.xlu0 %290
    %v293 = vsel %vm57, %v291, 0
    %295 = vmatprep.subr.bf16.mxu0 0
    %296 = vmatpush1.bf16.msra.mxu0 %v26
    %297 = vmatprep.subr.bf16.mxu0 0
    %298 = vmatpush1.bf16.msra.mxu0 %v27
    %299 = vmatprep.subr.bf16.mxu0 0
    %300 = vmatpush1.bf16.msra.mxu0 0
    %301 = vmatprep.subr.bf16.mxu0 0
    %302 = vmatpush1.bf16.msra.mxu0 0
    %303 = vmatprep.subr.bf16.mxu0 0
    %304 = vmatpush1.bf16.msra.mxu0 0
    %305 = vmatprep.subr.bf16.mxu0 0
    %306 = vmatpush1.bf16.msra.mxu0 0
    %307 = vmatprep.subr.bf16.mxu0 0
    %308 = vmatpush1.bf16.msra.mxu0 0
    %309 = vmatprep.subr.bf16.mxu0 0
    %310 = vmatpush1.bf16.msra.mxu0 0
    %311 = vmatprep.subr.bf16.mxu0 0
    %312 = vmatpush1.bf16.msra.mxu0 0
    %313 = vmatprep.subr.bf16.mxu0 0
    %314 = vmatpush1.bf16.msra.mxu0 0
    %315 = vmatprep.subr.bf16.mxu0 0
    %316 = vmatpush1.bf16.msra.mxu0 0
    %317 = vmatprep.subr.bf16.mxu0 0
    %318 = vmatpush1.bf16.msra.mxu0 0
    %319 = vmatprep.subr.bf16.mxu0 0
    %320 = vmatpush1.bf16.msra.mxu0 0
    %321 = vmatprep.subr.bf16.mxu0 0
    %322 = vmatpush1.bf16.msra.mxu0 0
    %323 = vmatprep.subr.bf16.mxu0 0
    %324 = vmatpush1.bf16.msra.mxu0 0
    %325 = vmatprep.subr.bf16.mxu0 0
    %326 = vmatpush1.bf16.msra.mxu0 0
    %327 = vmatprep.mubr.bf16.mxu0 0
    %328 = vmatmul.mubr.bf16.gmra.mrb[0].mxu0 %v293
    %v329 = vpop.f32.mrb[0].mxu0
    %v330 = vadd.f32 0.0, %v329
    %v331 = vpop.f32.mrb[0].mxu0
    %v332 = vpop.f32.mrb[0].mxu0
    %v333 = vadd.f32 0.0, %v332
    %v334 = vpop.f32.mrb[0].mxu0
    %335 = vdwg.mxu0
    %v336 = vadd.f32 %v125, %v330
    %v337 = vadd.f32 %v128, %v333
    %v338 = vmul.f32 %v336, %v184
    %v339 = vmul.f32 %v337, %v184
    %v340 = vtanh.pop %v338
    %v341 = vtanh.pop %v339
    %v342 = vmul.f32 %v340, %v184
    %v343 = vmul.f32 %v341, %v184
    %v344 = vadd.f32 %v342, %v185
    %v345 = vadd.f32 %v343, %v185
    %v346 = vmul.f32 %v344, %v260
    %v347 = vmul.f32 %v345, %v261
    %350 = vrot.lane.b32.xlu0 %v344, 64
    %v351 = vpop.permute.xlu0 %350
    %352 = vrot.lane.b32.xlu0 %v345, 64
    %v353 = vpop.permute.xlu0 %352
    %v356 = vmul.f32 %v344, %v351
    %v357 = vmul.f32 %v345, %v353
    %360 = vrot.lane.b32.xlu0 %v356, 32
    %v361 = vpop.permute.xlu0 %360
    %362 = vrot.lane.b32.xlu0 %v357, 32
    %v363 = vpop.permute.xlu0 %362
    %v366 = vadd.f32 %v346, %v361
    %v367 = vadd.f32 %v347, %v363
    %v368 = vtanh.pop %v366
    %v369 = vtanh.pop %v367
    %372 = vrot.lane.b32.xlu0 %v368, 64
    %v373 = vpop.permute.xlu0 %372
    %374 = vrot.lane.b32.xlu0 %v369, 64
    %v375 = vpop.permute.xlu0 %374
    %v378 = vmul.f32 %v344, %v373
    %v379 = vmul.f32 %v345, %v375
    %v380 = vld [vmem:[%s1 + $0x10] sm:$0xff]
    %v381 = vld [vmem:[%s1 + $0x18] sm:$0xff]
    %384 = vrot.lane.b32.xlu0 %v378, 32
    %v385 = vpop.permute.xlu0 %384
    %386 = vrot.lane.b32.xlu0 %v379, 32
    %v387 = vpop.permute.xlu0 %386
    %v390 = vmul.f32 %v380, %v385
    %v391 = vmul.f32 %v381, %v387
    %v392 = vadd.f32 %v286, %v390
    %v393 = vadd.f32 %v287, %v391
    %v394 = vpack.c.bf16 %v379, %v378
    %396 = vrot.lane.b32.xlu0 %v394, 32
    %v397 = vpop.permute.xlu0 %396
    %v399 = vsel %vm57, %v397, 0
    %401 = vmatprep.subr.bf16.mxu0 0
    %402 = vmatpush1.bf16.msra.mxu0 %v26
    %403 = vmatprep.subr.bf16.mxu0 0
    %404 = vmatpush1.bf16.msra.mxu0 %v27
    %405 = vmatprep.subr.bf16.mxu0 0
    %406 = vmatpush1.bf16.msra.mxu0 0
    %407 = vmatprep.subr.bf16.mxu0 0
    %408 = vmatpush1.bf16.msra.mxu0 0
    %409 = vmatprep.subr.bf16.mxu0 0
    %410 = vmatpush1.bf16.msra.mxu0 0
    %411 = vmatprep.subr.bf16.mxu0 0
    %412 = vmatpush1.bf16.msra.mxu0 0
    %413 = vmatprep.subr.bf16.mxu0 0
    %414 = vmatpush1.bf16.msra.mxu0 0
    %415 = vmatprep.subr.bf16.mxu0 0
    %416 = vmatpush1.bf16.msra.mxu0 0
    %417 = vmatprep.subr.bf16.mxu0 0
    %418 = vmatpush1.bf16.msra.mxu0 0
    %419 = vmatprep.subr.bf16.mxu0 0
    %420 = vmatpush1.bf16.msra.mxu0 0
    %421 = vmatprep.subr.bf16.mxu0 0
    %422 = vmatpush1.bf16.msra.mxu0 0
    %423 = vmatprep.subr.bf16.mxu0 0
    %424 = vmatpush1.bf16.msra.mxu0 0
    %425 = vmatprep.subr.bf16.mxu0 0
    %426 = vmatpush1.bf16.msra.mxu0 0
    %427 = vmatprep.subr.bf16.mxu0 0
    %428 = vmatpush1.bf16.msra.mxu0 0
    %429 = vmatprep.subr.bf16.mxu0 0
    %430 = vmatpush1.bf16.msra.mxu0 0
    %431 = vmatprep.subr.bf16.mxu0 0
    %432 = vmatpush1.bf16.msra.mxu0 0
    %433 = vmatprep.mubr.bf16.mxu0 0
    %434 = vmatmul.mubr.bf16.gmra.mrb[0].mxu0 %v399
    %v435 = vpop.f32.mrb[0].mxu0
    %v436 = vadd.f32 0.0, %v435
    %v437 = vpop.f32.mrb[0].mxu0
    %v438 = vpop.f32.mrb[0].mxu0
    %v439 = vadd.f32 0.0, %v438
    %v440 = vpop.f32.mrb[0].mxu0
    %441 = vdwg.mxu0
    %v442 = vadd.f32 %v133, %v436
    %v443 = vadd.f32 %v136, %v439
    %v444 = vmul.f32 %v442, %v184
    %v445 = vmul.f32 %v443, %v184
    %v446 = vtanh.pop %v444
    %v447 = vtanh.pop %v445
    %v448 = vmul.f32 %v446, %v184
    %v449 = vmul.f32 %v447, %v184
    %v450 = vadd.f32 %v448, %v185
    %v451 = vadd.f32 %v449, %v185
    %v452 = vmul.f32 %v450, %v366
    %v453 = vmul.f32 %v451, %v367
    %456 = vrot.lane.b32.xlu0 %v450, 64
    %v457 = vpop.permute.xlu0 %456
    %458 = vrot.lane.b32.xlu0 %v451, 64
    %v459 = vpop.permute.xlu0 %458
    %v462 = vmul.f32 %v450, %v457
    %v463 = vmul.f32 %v451, %v459
    %466 = vrot.lane.b32.xlu0 %v462, 32
    %v467 = vpop.permute.xlu0 %466
    %468 = vrot.lane.b32.xlu0 %v463, 32
    %v469 = vpop.permute.xlu0 %468
    %v472 = vadd.f32 %v452, %v467
    %v473 = vadd.f32 %v453, %v469
    %v474 = vtanh.pop %v472
    %v475 = vtanh.pop %v473
    %478 = vrot.lane.b32.xlu0 %v474, 64
    %v479 = vpop.permute.xlu0 %478
    %480 = vrot.lane.b32.xlu0 %v475, 64
    %v481 = vpop.permute.xlu0 %480
    %v484 = vmul.f32 %v450, %v479
    %v485 = vmul.f32 %v451, %v481
    %v486 = vld [vmem:[%s1 + $0x20] sm:$0xff]
    %v487 = vld [vmem:[%s1 + $0x28] sm:$0xff]
    %490 = vrot.lane.b32.xlu0 %v484, 32
    %v491 = vpop.permute.xlu0 %490
    %492 = vrot.lane.b32.xlu0 %v485, 32
    %v493 = vpop.permute.xlu0 %492
    %v496 = vmul.f32 %v486, %v491
    %v497 = vmul.f32 %v487, %v493
    %v498 = vadd.f32 %v392, %v496
    %v499 = vadd.f32 %v393, %v497
    %v500 = vpack.c.bf16 %v485, %v484
    %502 = vrot.lane.b32.xlu0 %v500, 32
    %v503 = vpop.permute.xlu0 %502
    %v505 = vsel %vm57, %v503, 0
    %507 = vmatprep.subr.bf16.mxu0 0
    %508 = vmatpush1.bf16.msra.mxu0 %v26
    %509 = vmatprep.subr.bf16.mxu0 0
    %510 = vmatpush1.bf16.msra.mxu0 %v27
    %511 = vmatprep.subr.bf16.mxu0 0
    %512 = vmatpush1.bf16.msra.mxu0 0
    %513 = vmatprep.subr.bf16.mxu0 0
    %514 = vmatpush1.bf16.msra.mxu0 0
    %515 = vmatprep.subr.bf16.mxu0 0
    %516 = vmatpush1.bf16.msra.mxu0 0
    %517 = vmatprep.subr.bf16.mxu0 0
    %518 = vmatpush1.bf16.msra.mxu0 0
    %519 = vmatprep.subr.bf16.mxu0 0
    %520 = vmatpush1.bf16.msra.mxu0 0
    %521 = vmatprep.subr.bf16.mxu0 0
    %522 = vmatpush1.bf16.msra.mxu0 0
    %523 = vmatprep.subr.bf16.mxu0 0
    %524 = vmatpush1.bf16.msra.mxu0 0
    %525 = vmatprep.subr.bf16.mxu0 0
    %526 = vmatpush1.bf16.msra.mxu0 0
    %527 = vmatprep.subr.bf16.mxu0 0
    %528 = vmatpush1.bf16.msra.mxu0 0
    %529 = vmatprep.subr.bf16.mxu0 0
    %530 = vmatpush1.bf16.msra.mxu0 0
    %531 = vmatprep.subr.bf16.mxu0 0
    %532 = vmatpush1.bf16.msra.mxu0 0
    %533 = vmatprep.subr.bf16.mxu0 0
    %534 = vmatpush1.bf16.msra.mxu0 0
    %535 = vmatprep.subr.bf16.mxu0 0
    %536 = vmatpush1.bf16.msra.mxu0 0
    %537 = vmatprep.subr.bf16.mxu0 0
    %538 = vmatpush1.bf16.msra.mxu0 0
    %539 = vmatprep.mubr.bf16.mxu0 0
    %540 = vmatmul.mubr.bf16.gmra.mrb[0].mxu0 %v505
    %v541 = vpop.f32.mrb[0].mxu0
    %v542 = vadd.f32 0.0, %v541
    %v543 = vpop.f32.mrb[0].mxu0
    %v544 = vpop.f32.mrb[0].mxu0
    %v545 = vadd.f32 0.0, %v544
    %v546 = vpop.f32.mrb[0].mxu0
    %547 = vdwg.mxu0
    %v548 = vadd.f32 %v141, %v542
    %v549 = vadd.f32 %v144, %v545
    %v550 = vmul.f32 %v548, %v184
    %v551 = vmul.f32 %v549, %v184
    %v552 = vtanh.pop %v550
    %v553 = vtanh.pop %v551
    %v554 = vmul.f32 %v552, %v184
    %v555 = vmul.f32 %v553, %v184
    %v556 = vadd.f32 %v554, %v185
    %v557 = vadd.f32 %v555, %v185
    %v558 = vmul.f32 %v556, %v472
    %v559 = vmul.f32 %v557, %v473
    %562 = vrot.lane.b32.xlu0 %v556, 64
    %v563 = vpop.permute.xlu0 %562
    %564 = vrot.lane.b32.xlu0 %v557, 64
    %v565 = vpop.permute.xlu0 %564
    %v568 = vmul.f32 %v556, %v563
    %v569 = vmul.f32 %v557, %v565
    %572 = vrot.lane.b32.xlu0 %v568, 32
    %v573 = vpop.permute.xlu0 %572
    %574 = vrot.lane.b32.xlu0 %v569, 32
    %v575 = vpop.permute.xlu0 %574
    %v578 = vadd.f32 %v558, %v573
    %v579 = vadd.f32 %v559, %v575
    %v580 = vtanh.pop %v578
    %v581 = vtanh.pop %v579
    %584 = vrot.lane.b32.xlu0 %v580, 64
    %v585 = vpop.permute.xlu0 %584
    %586 = vrot.lane.b32.xlu0 %v581, 64
    %v587 = vpop.permute.xlu0 %586
    %v590 = vmul.f32 %v556, %v585
    %v591 = vmul.f32 %v557, %v587
    %v592 = vld [vmem:[%s1 + $0x30] sm:$0xff]
    %v593 = vld [vmem:[%s1 + $0x38] sm:$0xff]
    %596 = vrot.lane.b32.xlu0 %v590, 32
    %v597 = vpop.permute.xlu0 %596
    %598 = vrot.lane.b32.xlu0 %v591, 32
    %v599 = vpop.permute.xlu0 %598
    %v602 = vmul.f32 %v592, %v597
    %v603 = vmul.f32 %v593, %v599
    %v604 = vadd.f32 %v498, %v602
    %v605 = vadd.f32 %v499, %v603
    %v606 = vpack.c.bf16 %v591, %v590
    %608 = vrot.lane.b32.xlu0 %v606, 32
    %v609 = vpop.permute.xlu0 %608
    %v611 = vsel %vm57, %v609, 0
    %613 = vmatprep.subr.bf16.mxu0 0
    %614 = vmatpush1.bf16.msra.mxu0 %v26
    %615 = vmatprep.subr.bf16.mxu0 0
    %616 = vmatpush1.bf16.msra.mxu0 %v27
    %617 = vmatprep.subr.bf16.mxu0 0
    %618 = vmatpush1.bf16.msra.mxu0 0
    %619 = vmatprep.subr.bf16.mxu0 0
    %620 = vmatpush1.bf16.msra.mxu0 0
    %621 = vmatprep.subr.bf16.mxu0 0
    %622 = vmatpush1.bf16.msra.mxu0 0
    %623 = vmatprep.subr.bf16.mxu0 0
    %624 = vmatpush1.bf16.msra.mxu0 0
    %625 = vmatprep.subr.bf16.mxu0 0
    %626 = vmatpush1.bf16.msra.mxu0 0
    %627 = vmatprep.subr.bf16.mxu0 0
    %628 = vmatpush1.bf16.msra.mxu0 0
    %629 = vmatprep.subr.bf16.mxu0 0
    %630 = vmatpush1.bf16.msra.mxu0 0
    %631 = vmatprep.subr.bf16.mxu0 0
    %632 = vmatpush1.bf16.msra.mxu0 0
    %633 = vmatprep.subr.bf16.mxu0 0
    %634 = vmatpush1.bf16.msra.mxu0 0
    %635 = vmatprep.subr.bf16.mxu0 0
    %636 = vmatpush1.bf16.msra.mxu0 0
    %637 = vmatprep.subr.bf16.mxu0 0
    %638 = vmatpush1.bf16.msra.mxu0 0
    %639 = vmatprep.subr.bf16.mxu0 0
    %640 = vmatpush1.bf16.msra.mxu0 0
    %641 = vmatprep.subr.bf16.mxu0 0
    %642 = vmatpush1.bf16.msra.mxu0 0
    %643 = vmatprep.subr.bf16.mxu0 0
    %644 = vmatpush1.bf16.msra.mxu0 0
    %645 = vmatprep.mubr.bf16.mxu0 0
    %646 = vmatmul.mubr.bf16.gmra.mrb[0].mxu0 %v611
    %v647 = vpop.f32.mrb[0].mxu0
    %v648 = vadd.f32 0.0, %v647
    %v649 = vpop.f32.mrb[0].mxu0
    %v650 = vpop.f32.mrb[0].mxu0
    %v651 = vadd.f32 0.0, %v650
    %v652 = vpop.f32.mrb[0].mxu0
    %653 = vdwg.mxu0
    %v654 = vadd.f32 %v149, %v648
    %v655 = vadd.f32 %v152, %v651
    %v656 = vmul.f32 %v654, %v184
    %v657 = vmul.f32 %v655, %v184
    %v658 = vtanh.pop %v656
    %v659 = vtanh.pop %v657
    %v660 = vmul.f32 %v658, %v184
    %v661 = vmul.f32 %v659, %v184
    %v662 = vadd.f32 %v660, %v185
    %v663 = vadd.f32 %v661, %v185
    %v664 = vmul.f32 %v662, %v578
    %v665 = vmul.f32 %v663, %v579
    %668 = vrot.lane.b32.xlu0 %v662, 64
    %v669 = vpop.permute.xlu0 %668
    %670 = vrot.lane.b32.xlu0 %v663, 64
    %v671 = vpop.permute.xlu0 %670
    %v674 = vmul.f32 %v662, %v669
    %v675 = vmul.f32 %v663, %v671
    %678 = vrot.lane.b32.xlu0 %v674, 32
    %v679 = vpop.permute.xlu0 %678
    %680 = vrot.lane.b32.xlu0 %v675, 32
    %v681 = vpop.permute.xlu0 %680
    %v684 = vadd.f32 %v664, %v679
    %v685 = vadd.f32 %v665, %v681
    %v686 = vtanh.pop %v684
    %v687 = vtanh.pop %v685
    %690 = vrot.lane.b32.xlu0 %v686, 64
    %v691 = vpop.permute.xlu0 %690
    %692 = vrot.lane.b32.xlu0 %v687, 64
    %v693 = vpop.permute.xlu0 %692
    %v696 = vmul.f32 %v662, %v691
    %v697 = vmul.f32 %v663, %v693
    %v698 = vld [vmem:[%s1 + $0x40] sm:$0xff]
    %v699 = vld [vmem:[%s1 + $0x48] sm:$0xff]
    %702 = vrot.lane.b32.xlu0 %v696, 32
    %v703 = vpop.permute.xlu0 %702
    %704 = vrot.lane.b32.xlu0 %v697, 32
    %v705 = vpop.permute.xlu0 %704
    %v708 = vmul.f32 %v698, %v703
    %v709 = vmul.f32 %v699, %v705
    %v710 = vadd.f32 %v604, %v708
    %v711 = vadd.f32 %v605, %v709
    %v712 = vpack.c.bf16 %v697, %v696
    %714 = vrot.lane.b32.xlu0 %v712, 32
    %v715 = vpop.permute.xlu0 %714
    %v717 = vsel %vm57, %v715, 0
    %719 = vmatprep.subr.bf16.mxu0 0
    %720 = vmatpush1.bf16.msra.mxu0 %v26
    %721 = vmatprep.subr.bf16.mxu0 0
    %722 = vmatpush1.bf16.msra.mxu0 %v27
    %723 = vmatprep.subr.bf16.mxu0 0
    %724 = vmatpush1.bf16.msra.mxu0 0
    %725 = vmatprep.subr.bf16.mxu0 0
    %726 = vmatpush1.bf16.msra.mxu0 0
    %727 = vmatprep.subr.bf16.mxu0 0
    %728 = vmatpush1.bf16.msra.mxu0 0
    %729 = vmatprep.subr.bf16.mxu0 0
    %730 = vmatpush1.bf16.msra.mxu0 0
    %731 = vmatprep.subr.bf16.mxu0 0
    %732 = vmatpush1.bf16.msra.mxu0 0
    %733 = vmatprep.subr.bf16.mxu0 0
    %734 = vmatpush1.bf16.msra.mxu0 0
    %735 = vmatprep.subr.bf16.mxu0 0
    %736 = vmatpush1.bf16.msra.mxu0 0
    %737 = vmatprep.subr.bf16.mxu0 0
    %738 = vmatpush1.bf16.msra.mxu0 0
    %739 = vmatprep.subr.bf16.mxu0 0
    %740 = vmatpush1.bf16.msra.mxu0 0
    %741 = vmatprep.subr.bf16.mxu0 0
    %742 = vmatpush1.bf16.msra.mxu0 0
    %743 = vmatprep.subr.bf16.mxu0 0
    %744 = vmatpush1.bf16.msra.mxu0 0
    %745 = vmatprep.subr.bf16.mxu0 0
    %746 = vmatpush1.bf16.msra.mxu0 0
    %747 = vmatprep.subr.bf16.mxu0 0
    %748 = vmatpush1.bf16.msra.mxu0 0
    %749 = vmatprep.subr.bf16.mxu0 0
    %750 = vmatpush1.bf16.msra.mxu0 0
    %751 = vmatprep.mubr.bf16.mxu0 0
    %752 = vmatmul.mubr.bf16.gmra.mrb[0].mxu0 %v717
    %v753 = vpop.f32.mrb[0].mxu0
    %v754 = vadd.f32 0.0, %v753
    %v755 = vpop.f32.mrb[0].mxu0
    %v756 = vpop.f32.mrb[0].mxu0
    %v757 = vadd.f32 0.0, %v756
    %v758 = vpop.f32.mrb[0].mxu0
    %759 = vdwg.mxu0
    %v760 = vadd.f32 %v157, %v754
    %v761 = vadd.f32 %v160, %v757
    %v762 = vmul.f32 %v760, %v184
    %v763 = vmul.f32 %v761, %v184
    %v764 = vtanh.pop %v762
    %v765 = vtanh.pop %v763
    %v766 = vmul.f32 %v764, %v184
    %v767 = vmul.f32 %v765, %v184
    %v768 = vadd.f32 %v766, %v185
    %v769 = vadd.f32 %v767, %v185
    %v770 = vmul.f32 %v768, %v684
    %v771 = vmul.f32 %v769, %v685
    %774 = vrot.lane.b32.xlu0 %v768, 64
    %v775 = vpop.permute.xlu0 %774
    %776 = vrot.lane.b32.xlu0 %v769, 64
    %v777 = vpop.permute.xlu0 %776
    %v780 = vmul.f32 %v768, %v775
    %v781 = vmul.f32 %v769, %v777
    %784 = vrot.lane.b32.xlu0 %v780, 32
    %v785 = vpop.permute.xlu0 %784
    %786 = vrot.lane.b32.xlu0 %v781, 32
    %v787 = vpop.permute.xlu0 %786
    %v790 = vadd.f32 %v770, %v785
    %v791 = vadd.f32 %v771, %v787
    %v792 = vtanh.pop %v790
    %v793 = vtanh.pop %v791
    %796 = vrot.lane.b32.xlu0 %v792, 64
    %v797 = vpop.permute.xlu0 %796
    %798 = vrot.lane.b32.xlu0 %v793, 64
    %v799 = vpop.permute.xlu0 %798
    %v802 = vmul.f32 %v768, %v797
    %v803 = vmul.f32 %v769, %v799
    %v804 = vld [vmem:[%s1 + $0x50] sm:$0xff]
    %v805 = vld [vmem:[%s1 + $0x58] sm:$0xff]
    %808 = vrot.lane.b32.xlu0 %v802, 32
    %v809 = vpop.permute.xlu0 %808
    %810 = vrot.lane.b32.xlu0 %v803, 32
    %v811 = vpop.permute.xlu0 %810
    %v814 = vmul.f32 %v804, %v809
    %v815 = vmul.f32 %v805, %v811
    %v816 = vadd.f32 %v710, %v814
    %v817 = vadd.f32 %v711, %v815
    %v818 = vpack.c.bf16 %v803, %v802
    %820 = vrot.lane.b32.xlu0 %v818, 32
    %v821 = vpop.permute.xlu0 %820
    %v823 = vsel %vm57, %v821, 0
    %825 = vmatprep.subr.bf16.mxu0 0
    %826 = vmatpush1.bf16.msra.mxu0 %v26
    %827 = vmatprep.subr.bf16.mxu0 0
    %828 = vmatpush1.bf16.msra.mxu0 %v27
    %829 = vmatprep.subr.bf16.mxu0 0
    %830 = vmatpush1.bf16.msra.mxu0 0
    %831 = vmatprep.subr.bf16.mxu0 0
    %832 = vmatpush1.bf16.msra.mxu0 0
    %833 = vmatprep.subr.bf16.mxu0 0
    %834 = vmatpush1.bf16.msra.mxu0 0
    %835 = vmatprep.subr.bf16.mxu0 0
    %836 = vmatpush1.bf16.msra.mxu0 0
    %837 = vmatprep.subr.bf16.mxu0 0
    %838 = vmatpush1.bf16.msra.mxu0 0
    %839 = vmatprep.subr.bf16.mxu0 0
    %840 = vmatpush1.bf16.msra.mxu0 0
    %841 = vmatprep.subr.bf16.mxu0 0
    %842 = vmatpush1.bf16.msra.mxu0 0
    %843 = vmatprep.subr.bf16.mxu0 0
    %844 = vmatpush1.bf16.msra.mxu0 0
    %845 = vmatprep.subr.bf16.mxu0 0
    %846 = vmatpush1.bf16.msra.mxu0 0
    %847 = vmatprep.subr.bf16.mxu0 0
    %848 = vmatpush1.bf16.msra.mxu0 0
    %849 = vmatprep.subr.bf16.mxu0 0
    %850 = vmatpush1.bf16.msra.mxu0 0
    %851 = vmatprep.subr.bf16.mxu0 0
    %852 = vmatpush1.bf16.msra.mxu0 0
    %853 = vmatprep.subr.bf16.mxu0 0
    %854 = vmatpush1.bf16.msra.mxu0 0
    %855 = vmatprep.subr.bf16.mxu0 0
    %856 = vmatpush1.bf16.msra.mxu0 0
    %857 = vmatprep.mubr.bf16.mxu0 0
    %858 = vmatmul.mubr.bf16.gmra.mrb[0].mxu0 %v823
    %v859 = vpop.f32.mrb[0].mxu0
    %v860 = vadd.f32 0.0, %v859
    %v861 = vpop.f32.mrb[0].mxu0
    %v862 = vpop.f32.mrb[0].mxu0
    %v863 = vadd.f32 0.0, %v862
    %v864 = vpop.f32.mrb[0].mxu0
    %865 = vdwg.mxu0
    %v866 = vadd.f32 %v165, %v860
    %v867 = vadd.f32 %v168, %v863
    %v868 = vmul.f32 %v866, %v184
    %v869 = vmul.f32 %v867, %v184
    %v870 = vtanh.pop %v868
    %v871 = vtanh.pop %v869
    %v872 = vmul.f32 %v870, %v184
    %v873 = vmul.f32 %v871, %v184
    %v874 = vadd.f32 %v872, %v185
    %v875 = vadd.f32 %v873, %v185
    %v876 = vmul.f32 %v874, %v790
    %v877 = vmul.f32 %v875, %v791
    %880 = vrot.lane.b32.xlu0 %v874, 64
    %v881 = vpop.permute.xlu0 %880
    %882 = vrot.lane.b32.xlu0 %v875, 64
    %v883 = vpop.permute.xlu0 %882
    %v886 = vmul.f32 %v874, %v881
    %v887 = vmul.f32 %v875, %v883
    %890 = vrot.lane.b32.xlu0 %v886, 32
    %v891 = vpop.permute.xlu0 %890
    %892 = vrot.lane.b32.xlu0 %v887, 32
    %v893 = vpop.permute.xlu0 %892
    %v896 = vadd.f32 %v876, %v891
    %v897 = vadd.f32 %v877, %v893
    %v898 = vtanh.pop %v896
    %v899 = vtanh.pop %v897
    %902 = vrot.lane.b32.xlu0 %v898, 64
    %v903 = vpop.permute.xlu0 %902
    %904 = vrot.lane.b32.xlu0 %v899, 64
    %v905 = vpop.permute.xlu0 %904
    %v908 = vmul.f32 %v874, %v903
    %v909 = vmul.f32 %v875, %v905
    %v910 = vld [vmem:[%s1 + $0x60] sm:$0xff]
    %v911 = vld [vmem:[%s1 + $0x68] sm:$0xff]
    %914 = vrot.lane.b32.xlu0 %v908, 32
    %v915 = vpop.permute.xlu0 %914
    %916 = vrot.lane.b32.xlu0 %v909, 32
    %v917 = vpop.permute.xlu0 %916
    %v920 = vmul.f32 %v910, %v915
    %v921 = vmul.f32 %v911, %v917
    %v922 = vadd.f32 %v816, %v920
    %v923 = vadd.f32 %v817, %v921
    %v924 = vpack.c.bf16 %v909, %v908
    %926 = vrot.lane.b32.xlu0 %v924, 32
    %v927 = vpop.permute.xlu0 %926
    %v929 = vsel %vm57, %v927, 0
    %931 = vmatprep.subr.bf16.mxu0 0
    %932 = vmatpush1.bf16.msra.mxu0 %v26
    %933 = vmatprep.subr.bf16.mxu0 0
    %934 = vmatpush1.bf16.msra.mxu0 %v27
    %935 = vmatprep.subr.bf16.mxu0 0
    %936 = vmatpush1.bf16.msra.mxu0 0
    %937 = vmatprep.subr.bf16.mxu0 0
    %938 = vmatpush1.bf16.msra.mxu0 0
    %939 = vmatprep.subr.bf16.mxu0 0
    %940 = vmatpush1.bf16.msra.mxu0 0
    %941 = vmatprep.subr.bf16.mxu0 0
    %942 = vmatpush1.bf16.msra.mxu0 0
    %943 = vmatprep.subr.bf16.mxu0 0
    %944 = vmatpush1.bf16.msra.mxu0 0
    %945 = vmatprep.subr.bf16.mxu0 0
    %946 = vmatpush1.bf16.msra.mxu0 0
    %947 = vmatprep.subr.bf16.mxu0 0
    %948 = vmatpush1.bf16.msra.mxu0 0
    %949 = vmatprep.subr.bf16.mxu0 0
    %950 = vmatpush1.bf16.msra.mxu0 0
    %951 = vmatprep.subr.bf16.mxu0 0
    %952 = vmatpush1.bf16.msra.mxu0 0
    %953 = vmatprep.subr.bf16.mxu0 0
    %954 = vmatpush1.bf16.msra.mxu0 0
    %955 = vmatprep.subr.bf16.mxu0 0
    %956 = vmatpush1.bf16.msra.mxu0 0
    %957 = vmatprep.subr.bf16.mxu0 0
    %958 = vmatpush1.bf16.msra.mxu0 0
    %959 = vmatprep.subr.bf16.mxu0 0
    %960 = vmatpush1.bf16.msra.mxu0 0
    %961 = vmatprep.subr.bf16.mxu0 0
    %962 = vmatpush1.bf16.msra.mxu0 0
    %963 = vmatprep.mubr.bf16.mxu0 0
    %964 = vmatmul.mubr.bf16.gmra.mrb[0].mxu0 %v929
    %v965 = vpop.f32.mrb[0].mxu0
    %v966 = vadd.f32 0.0, %v965
    %v967 = vpop.f32.mrb[0].mxu0
    %v968 = vpop.f32.mrb[0].mxu0
    %v969 = vadd.f32 0.0, %v968
    %v970 = vpop.f32.mrb[0].mxu0
    %971 = vdwg.mxu0
    %v972 = vadd.f32 %v173, %v966
    %v973 = vadd.f32 %v176, %v969
    %v974 = vmul.f32 %v972, %v184
    %v975 = vmul.f32 %v973, %v184
    %v976 = vtanh.pop %v974
    %v977 = vtanh.pop %v975
    %v978 = vmul.f32 %v976, %v184
    %v979 = vmul.f32 %v977, %v184
    %v980 = vadd.f32 %v978, %v185
    %v981 = vadd.f32 %v979, %v185
    %v982 = vmul.f32 %v980, %v896
    %v983 = vmul.f32 %v981, %v897
    %986 = vrot.lane.b32.xlu0 %v980, 64
    %v987 = vpop.permute.xlu0 %986
    %988 = vrot.lane.b32.xlu0 %v981, 64
    %v989 = vpop.permute.xlu0 %988
    %v992 = vmul.f32 %v980, %v987
    %v993 = vmul.f32 %v981, %v989
    %996 = vrot.lane.b32.xlu0 %v992, 32
    %v997 = vpop.permute.xlu0 %996
    %998 = vrot.lane.b32.xlu0 %v993, 32
    %v999 = vpop.permute.xlu0 %998
    %v1002 = vadd.f32 %v982, %v997
    %v1003 = vadd.f32 %v983, %v999
    %v1004 = vtanh.pop %v1002
    %v1005 = vtanh.pop %v1003
    %1008 = vrot.lane.b32.xlu0 %v1004, 64
    %v1009 = vpop.permute.xlu0 %1008
    %1010 = vrot.lane.b32.xlu0 %v1005, 64
    %v1011 = vpop.permute.xlu0 %1010
    %v1014 = vmul.f32 %v980, %v1009
    %v1015 = vmul.f32 %v981, %v1011
    %v1016 = vld [vmem:[%s1 + $0x70] sm:$0xff]
    %v1017 = vld [vmem:[%s1 + $0x78] sm:$0xff]
    %1020 = vrot.lane.b32.xlu0 %v1014, 32
    %v1021 = vpop.permute.xlu0 %1020
    %1022 = vrot.lane.b32.xlu0 %v1015, 32
    %v1023 = vpop.permute.xlu0 %1022
    %v1026 = vmul.f32 %v1016, %v1021
    %v1027 = vmul.f32 %v1017, %v1023
    %v1028 = vadd.f32 %v922, %v1026
    %v1029 = vadd.f32 %v923, %v1027
    %v1030 = vtanh.pop %v1028
    %v1031 = vmax.f32 %v1029, 0.0
    %v1032 = vsel %vm57, %v1031, 0.0
    %v1033 = vrot.slane %v1032, 4
    %v1034 = vadd.f32 %v1032, %v1033
    %v1035 = vrot.slane %v1034, 2
    %v1036 = vadd.f32 %v1034, %v1035
    %v1037 = vrot.slane %v1036, 1
    %v1038 = vadd.f32 %v1036, %v1037
    %v1039 = vrcp.pop 8.0
    %v1040 = vmul.f32 %v1038, %v1039
    %v1041 = vsub.f32 %v1031, %v1040
    %v1042 = vmul.f32 %v1041, %v1041
    %v1043 = vsel %vm57, %v1042, 0.0
    %v1044 = vrot.slane %v1043, 4
    %v1045 = vadd.f32 %v1043, %v1044
    %v1046 = vrot.slane %v1045, 2
    %v1047 = vadd.f32 %v1045, %v1046
    %v1048 = vrot.slane %v1047, 1
    %v1049 = vadd.f32 %v1047, %v1048
    %v1050 = vmul.f32 %v1049, %v1039
    %v1051 = vld [vmem:[%s2 + $0x48] sm:$0x1]
    %v1052 = vld [vmem:[%s2 + $0x50] sm:$0x1]
    %v1053 = vadd.f32 %v1050, 1e-05
    %v1054 = vrsqrt.pop %v1053
    %v1055 = vmul.f32 %v1041, %v1054
    %v1056 = vlaneseq
    %v1057 = vshrl.u32 %v1056, 7
    %v1058 = vsub.s32 0, %v1057
    %v1059 = vrot.slane %v1051, %v1058
    %v1060 = vmul.f32 %v1055, %v1059
    %v1061 = vlaneseq
    %v1062 = vshrl.u32 %v1061, 7
    %v1063 = vsub.s32 0, %v1062
    %v1064 = vrot.slane %v1052, %v1063
    %v1065 = vadd.f32 %v1060, %v1064
    %v1066 = vld [vmem:[%s2 + $0x58] sm:$0xff]
    %v1067 = vld [vmem:[%s2 + $0x60] sm:$0xff]
    %v1068 = vld [vmem:[%s2 + $0x68] sm:$0xff]
    %v1069 = vld [vmem:[%s2 + $0x70] sm:$0xff]
    %v1071 = vsel %vm57, %v1030, 0
    %v1074 = vsel %vm57, %v1065, 0
    %1076 = vmatprep.subr.mxu0 0.0
    %1077 = vmatpush1.xpose.msra.mxu0 %v1074
    %1078 = vmatprep.subr.mxu0 0.0
    %1079 = vmatpush1.xpose.msra.mxu0 0.0
    %1080 = vmatprep.subr.mxu0 0.0
    %1081 = vmatpush1.xpose.msra.mxu0 0.0
    %1082 = vmatprep.subr.mxu0 0.0
    %1083 = vmatpush1.xpose.msra.mxu0 0.0
    %1084 = vmatprep.subr.mxu0 0.0
    %1085 = vmatpush1.xpose.msra.mxu0 0.0
    %1086 = vmatprep.subr.mxu0 0.0
    %1087 = vmatpush1.xpose.msra.mxu0 0.0
    %1088 = vmatprep.subr.mxu0 0.0
    %1089 = vmatpush1.xpose.msra.mxu0 0.0
    %1090 = vmatprep.subr.mxu0 0.0
    %1091 = vmatpush1.xpose.msra.mxu0 0.0
    %1092 = vmatprep.subr.mxu0 0.0
    %1093 = vmatpush1.xpose.msra.mxu0 0.0
    %1094 = vmatprep.subr.mxu0 0.0
    %1095 = vmatpush1.xpose.msra.mxu0 0.0
    %1096 = vmatprep.subr.mxu0 0.0
    %1097 = vmatpush1.xpose.msra.mxu0 0.0
    %1098 = vmatprep.subr.mxu0 0.0
    %1099 = vmatpush1.xpose.msra.mxu0 0.0
    %1100 = vmatprep.subr.mxu0 0.0
    %1101 = vmatpush1.xpose.msra.mxu0 0.0
    %1102 = vmatprep.subr.mxu0 0.0
    %1103 = vmatpush1.xpose.msra.mxu0 0.0
    %1104 = vmatprep.subr.mxu0 0.0
    %1105 = vmatpush1.xpose.msra.mxu0 0.0
    %1106 = vmatprep.subr.mxu0 0.0
    %1107 = vmatpush1.xpose.msra.mxu0 0.0
    %1108 = vmatprep.subr.mxu0 0.0
    %1109 = vmatpush1.xpose.msra.mxu0 0.0
    %1110 = vmatprep.subr.mxu0 0.0
    %1111 = vmatpush1.xpose.msra.mxu0 0.0
    %1112 = vmatprep.subr.mxu0 0.0
    %1113 = vmatpush1.xpose.msra.mxu0 0.0
    %1114 = vmatprep.subr.mxu0 0.0
    %1115 = vmatpush1.xpose.msra.mxu0 0.0
    %1116 = vmatprep.subr.mxu0 0.0
    %1117 = vmatpush1.xpose.msra.mxu0 0.0
    %1118 = vmatprep.subr.mxu0 0.0
    %1119 = vmatpush1.xpose.msra.mxu0 0.0
    %1120 = vmatprep.subr.mxu0 0.0
    %1121 = vmatpush1.xpose.msra.mxu0 0.0
    %1122 = vmatprep.subr.mxu0 0.0
    %1123 = vmatpush1.xpose.msra.mxu0 0.0
    %1124 = vmatprep.subr.mxu0 0.0
    %1125 = vmatpush1.xpose.msra.mxu0 0.0
    %1126 = vmatprep.subr.mxu0 0.0
    %1127 = vmatpush1.xpose.msra.mxu0 0.0
    %1128 = vmatprep.subr.mxu0 0.0
    %1129 = vmatpush1.xpose.msra.mxu0 0.0
    %1130 = vmatprep.subr.mxu0 0.0
    %1131 = vmatpush1.xpose.msra.mxu0 0.0
    %1132 = vmatprep.subr.mxu0 0.0
    %1133 = vmatpush1.xpose.msra.mxu0 0.0
    %1134 = vmatprep.subr.mxu0 0.0
    %1135 = vmatpush1.xpose.msra.mxu0 0.0
    %1136 = vmatprep.subr.mxu0 0.0
    %1137 = vmatpush1.xpose.msra.mxu0 0.0
    %1138 = vmatprep.subr.mxu0 0.0
    %1139 = vmatpush1.xpose.msra.mxu0 0.0
    %1140 = vmatprep.mubr.f32.mxu0 0.0
    %1141 = vmatmul.mubr.f32.gmra.mrb[0].mxu0 %v1071
    %v1142 = vpop.f32.mrb[0].mxu0
    %v1143 = vadd.f32 0.0, %v1142
    %v1144 = vpop.f32.mrb[0].mxu0
    %1145 = vdwg.mxu0
    %1146 = vmatprep.subr.mxu0 0.0
    %1147 = vmatpush1.msra.mxu0 %v1066
    %1148 = vmatprep.subr.mxu0 0.0
    %1149 = vmatpush1.msra.mxu0 %v1067
    %1150 = vmatprep.subr.mxu0 0.0
    %1151 = vmatpush1.msra.mxu0 %v1068
    %1152 = vmatprep.subr.mxu0 0.0
    %1153 = vmatpush1.msra.mxu0 %v1069
    %1154 = vmatprep.subr.mxu0 0.0
    %1155 = vmatpush1.msra.mxu0 0.0
    %1156 = vmatprep.subr.mxu0 0.0
    %1157 = vmatpush1.msra.mxu0 0.0
    %1158 = vmatprep.subr.mxu0 0.0
    %1159 = vmatpush1.msra.mxu0 0.0
    %1160 = vmatprep.subr.mxu0 0.0
    %1161 = vmatpush1.msra.mxu0 0.0
    %1162 = vmatprep.subr.mxu0 0.0
    %1163 = vmatpush1.msra.mxu0 0.0
    %1164 = vmatprep.subr.mxu0 0.0
    %1165 = vmatpush1.msra.mxu0 0.0
    %1166 = vmatprep.subr.mxu0 0.0
    %1167 = vmatpush1.msra.mxu0 0.0
    %1168 = vmatprep.subr.mxu0 0.0
    %1169 = vmatpush1.msra.mxu0 0.0
    %1170 = vmatprep.subr.mxu0 0.0
    %1171 = vmatpush1.msra.mxu0 0.0
    %1172 = vmatprep.subr.mxu0 0.0
    %1173 = vmatpush1.msra.mxu0 0.0
    %1174 = vmatprep.subr.mxu0 0.0
    %1175 = vmatpush1.msra.mxu0 0.0
    %1176 = vmatprep.subr.mxu0 0.0
    %1177 = vmatpush1.msra.mxu0 0.0
    %1178 = vmatprep.subr.mxu0 0.0
    %1179 = vmatpush1.msra.mxu0 0.0
    %1180 = vmatprep.subr.mxu0 0.0
    %1181 = vmatpush1.msra.mxu0 0.0
    %1182 = vmatprep.subr.mxu0 0.0
    %1183 = vmatpush1.msra.mxu0 0.0
    %1184 = vmatprep.subr.mxu0 0.0
    %1185 = vmatpush1.msra.mxu0 0.0
    %1186 = vmatprep.subr.mxu0 0.0
    %1187 = vmatpush1.msra.mxu0 0.0
    %1188 = vmatprep.subr.mxu0 0.0
    %1189 = vmatpush1.msra.mxu0 0.0
    %1190 = vmatprep.subr.mxu0 0.0
    %1191 = vmatpush1.msra.mxu0 0.0
    %1192 = vmatprep.subr.mxu0 0.0
    %1193 = vmatpush1.msra.mxu0 0.0
    %1194 = vmatprep.subr.mxu0 0.0
    %1195 = vmatpush1.msra.mxu0 0.0
    %1196 = vmatprep.subr.mxu0 0.0
    %1197 = vmatpush1.msra.mxu0 0.0
    %1198 = vmatprep.subr.mxu0 0.0
    %1199 = vmatpush1.msra.mxu0 0.0
    %1200 = vmatprep.subr.mxu0 0.0
    %1201 = vmatpush1.msra.mxu0 0.0
    %1202 = vmatprep.subr.mxu0 0.0
    %1203 = vmatpush1.msra.mxu0 0.0
    %1204 = vmatprep.subr.mxu0 0.0
    %1205 = vmatpush1.msra.mxu0 0.0
    %1206 = vmatprep.subr.mxu0 0.0
    %1207 = vmatpush1.msra.mxu0 0.0
    %1208 = vmatprep.subr.mxu0 0.0
    %1209 = vmatpush1.msra.mxu0 0.0
    %1210 = vmatprep.mubr.f32.mxu0 0.0
    %1211 = vmatmul.mubr.f32.gmra.mrb[0].mxu0 %v1071
    %v1212 = vpop.f32.mrb[0].mxu0
    %v1213 = vadd.f32 0.0, %v1212
    %v1214 = vpop.f32.mrb[0].mxu0
    %1215 = vdwg.mxu0
    %v1216 = vmul.f32 %v1143, %v1213
    %v1217 = vlaneseq
    %v1218 = vshrl.u32 %v1217, 7
    %v1219 = vsub.s32 0, %v1218
    %v1220 = vrot.slane %v1216, %v1219
    %v1221 = vsub.f32 %v1216, %v1220
    %v1222 = vadd.f32 %v1221, 0.001
    %v1223 = vmax.f32 %v1222, 0.0
    %vm1224 = vcmask 64512
    %v1225 = vsel %vm1224, %v1223, 0.0
    %1226 = vadd.xlane.f32.xlu0 %v1225
    %v1227 = vpop.xlane.xlu0 %1226
    %v1228 = vrot.slane %v1227, 4
    %v1229 = vadd.f32 %v1227, %v1228
    %v1230 = vrot.slane %v1229, 2
    %v1231 = vadd.f32 %v1229, %v1230
    %v1232 = vrot.slane %v1231, 1
    %v1233 = vadd.f32 %v1231, %v1232
    %s1234 = vtos %v1233
    %s1235 = scalar_lea.smem [#allocation2], 0
    %1236 = sst [smem:[%s1235]] %s1234
    // Predicated region
    $region14: #{forward.1} parent=1 // pred_check
      _
    $region15: #{forward.1} parent=1 // pred_check_branch
      %1238 = sbr.rel (0) target = $region17
    $region16: #{forward.1} parent=1 // pred_region
      %s1240 = ssub.s32 16, 16
      %1241 = vsyncadd [#allocation3], %s1240
      %1244 = dma.smem_to_hbm [#allocation2], 16, %s3, [#allocation3]
    $region17: #{forward.1} parent=1 // pred_fallthru
      _
    // Predicated region
    $region18: #{forward.1} parent=1 // pred_check
      _
    $region19: #{forward.1} parent=1 // pred_check_branch
      %1246 = sbr.rel (0) target = $region21
    $region20: #{forward.1} parent=1 // pred_region
      %1247 = dma.done [#allocation3], 16
    $region21: #{forward.1} parent=1 // pred_fallthru
      _
    %1248 = sfence
    %1249 = vsyncpa [#allocation3], 1

</llo_original>
